<compile_context>
chip_gen: v7x
topology: tpu7x:2x2x1
jax: 0.10.0
libtpu: 0.0.40
codegen_flags: <defaults>
</compile_context>

<pallas_src>
import jax
import jax.numpy as jnp
from jax import lax
from jax.experimental import pallas as pl
from jax.experimental.pallas import tpu as pltpu


def inverted_residual_pallas(x_nchw, folded, block_h=8):
    N, Cin, H, W = x_nchw.shape
    Cexp = folded["b1"].shape[1]
    Cout = folded["bsum"].shape[1]

    th = block_h if H % block_h == 0 else H     # rows of output per grid step
    T = H // th
    tile = th * W                               # flattened output positions per step
    halo = (th + 2) * W                         # + one image row above / below
    l_pad = (H + 2) * W

    # NCHW -> zero-pad H by 1 row each side -> (N, (H+2)*W, Cin) bf16 for the MXU.
    xp = jnp.pad(x_nchw, ((0, 0), (0, 0), (1, 1), (0, 0)))
    xp = jnp.transpose(xp, (0, 2, 3, 1)).reshape(N, l_pad, Cin).astype(jnp.bfloat16)

    def kernel(x_ref, wcat_ref, b1_ref, wdw_ref, b2_ref, w3_ref, bsum_ref, o_ref):
        t = pl.program_id(1)
        nt = pl.num_programs(1)

        start = t * tile
        if tile % 128 == 0:
            start = pl.multiple_of(start, 128)
        x_tile = x_ref[0, pl.ds(start, halo), :]               # (halo, Cin) bf16

        # ---- fused 1x1 expansion + 1x1 residual conv (BN folded): one MXU call ----
        fused = jnp.dot(x_tile, wcat_ref[...],
                        preferred_element_type=jnp.float32)    # (halo, Cexp+Cout) f32
        h = jnp.clip(fused[:, :Cexp] + b1_ref[...], 0.0, 6.0)  # expansion + ReLU6
        res = fused[:, Cexp:]                                   # residual branch

        # Zero the halo rows that fall outside the image (the depthwise sees zero pad
        # on h, not on x).
        row = lax.broadcasted_iota(jnp.int32, (halo, 1), 0)
        bad = jnp.logical_or(jnp.logical_and(t == 0, row < W),
                             jnp.logical_and(t == nt - 1, row >= halo - W))
        h = jnp.where(bad, 0.0, h)

        # ---- depthwise 3x3, stride 1, pad 1 (BN folded) + ReLU6 ----
        # x-direction: two shifted + edge-masked copies (sublane shifts, XLU);
        # y-direction: aligned row-range slices of the haloed activation.
        col = row % W
        zrow = jnp.zeros((1, Cexp), jnp.float32)
        h_p = jnp.concatenate([h[1:], zrow], axis=0)            # h_p[i] = h[i+1]
        h_m = jnp.concatenate([zrow, h[:-1]], axis=0)           # h_m[i] = h[i-1]
        h_p = jnp.where(col < W - 1, h_p, 0.0)                  # mask row-crossings
        h_m = jnp.where(col > 0, h_m, 0.0)
        taps = (h_m, h, h_p)

        acc = None
        for dy in range(3):
            base = dy * W                                       # aligned (W % 8 == 0)
            for dx in range(3):
                term = taps[dx][base:base + tile] * wdw_ref[dy * 3 + dx]
                acc = term if acc is None else acc + term
        h2 = jnp.clip(acc + b2_ref[...], 0.0, 6.0)              # (tile, Cexp) f32

        # ---- 1x1 projection conv (BN folded) + residual + folded biases ----
        proj = jnp.dot(h2.astype(jnp.bfloat16), w3_ref[...],
                       preferred_element_type=jnp.float32)      # (tile, Cout)
        o_ref[0] = proj + res[W:W + tile, :] + bsum_ref[...]

    out = pl.pallas_call(
        kernel,
        out_shape=jax.ShapeDtypeStruct((N, H * W, Cout), jnp.float32),
        grid_spec=pltpu.PrefetchScalarGridSpec(
            num_scalar_prefetch=0,
            grid=(N, T),
            in_specs=[
                pl.BlockSpec((1, l_pad, Cin), lambda n, t: (n, 0, 0)),
                pl.BlockSpec((Cin, Cexp + Cout), lambda n, t: (0, 0)),
                pl.BlockSpec((1, Cexp), lambda n, t: (0, 0)),
                pl.BlockSpec((9, 1, Cexp), lambda n, t: (0, 0, 0)),
                pl.BlockSpec((1, Cexp), lambda n, t: (0, 0)),
                pl.BlockSpec((Cexp, Cout), lambda n, t: (0, 0)),
                pl.BlockSpec((1, Cout), lambda n, t: (0, 0)),
            ],
            out_specs=pl.BlockSpec((1, tile, Cout), lambda n, t: (n, t, 0)),
        ),
        compiler_params=pltpu.CompilerParams(
            dimension_semantics=("parallel", "parallel")),
    )(xp, folded["wcat"], folded["b1"], folded["wdw"], folded["b2"],
      folded["w3"], folded["bsum"])

    out = out.reshape(N, H, W, Cout)
    return jnp.transpose(out, (0, 3, 1, 2))                     # -> NCHW


# ----------------------------- parameter glue -----------------------------

def _make_bn(key, c):
    k1, k2, k3, k4 = jax.random.split(key, 4)
    gamma = jax.random.uniform(k1, (c,), jnp.float32, 0.5, 1.5)
    beta = jax.random.normal(k2, (c,), jnp.float32) * 0.1
    mean = jax.random.normal(k3, (c,), jnp.float32) * 0.1
    var = jax.random.uniform(k4, (c,), jnp.float32, 0.5, 1.5)
    return gamma, beta, mean, var


def _fold_bn(gamma, beta, mean, var, eps=1e-5):
    scale = gamma / jnp.sqrt(var + eps)
    shift = beta - mean * scale
    return scale, shift


def make_params(key, cin, cout, t):
    cexp = cin * t
    ks = jax.random.split(key, 8)
    return {
        # PyTorch Conv2d weight layouts
        "w1_t":   jax.random.normal(ks[0], (cexp, cin, 1, 1), jnp.float32) * 0.2,
        "wdw_t":  jax.random.normal(ks[1], (cexp, 1, 3, 3), jnp.float32) * 0.2,
        "w3_t":   jax.random.normal(ks[2], (cout, cexp, 1, 1), jnp.float32) * 0.2,
        "wres_t": jax.random.normal(ks[3], (cout, cin, 1, 1), jnp.float32) * 0.2,
        "bn1":    _make_bn(ks[4], cexp),
        "bn2":    _make_bn(ks[5], cexp),
        "bn3":    _make_bn(ks[6], cout),
        "bnres":  _make_bn(ks[7], cout),
    }


def fold_params(p):
    s1, b1 = _fold_bn(*p["bn1"])
    s2, b2 = _fold_bn(*p["bn2"])
    s3, b3 = _fold_bn(*p["bn3"])
    sr, br = _fold_bn(*p["bnres"])
    w1 = jnp.transpose(p["w1_t"][:, :, 0, 0]) * s1[None, :]        # (Cin, Cexp)
    wres = jnp.transpose(p["wres_t"][:, :, 0, 0]) * sr[None, :]    # (Cin, Cout)
    w3 = jnp.transpose(p["w3_t"][:, :, 0, 0]) * s3[None, :]        # (Cexp, Cout)
    wdw = (jnp.transpose(p["wdw_t"][:, 0], (1, 2, 0)).reshape(9, 1, -1)
           * s2[None, None, :])                                     # (9, 1, Cexp)
    return {
        "wcat": jnp.concatenate([w1, wres], axis=1).astype(jnp.bfloat16),
        "b1":   b1[None, :],
        "wdw":  wdw,
        "b2":   b2[None, :],
        "w3":   w3.astype(jnp.bfloat16),
        "bsum": (b3 + br)[None, :],
    }


# ------------------------- pure-JAX reference (NCHW, f32) -------------------------

def _bn_nchw(x, gamma, beta, mean, var, eps=1e-5):
    scale = gamma / jnp.sqrt(var + eps)
    shift = beta - mean * scale
    return x * scale[None, :, None, None] + shift[None, :, None, None]


def ref_forward(x, p, cexp):
    dn = ("NCHW", "OIHW", "NCHW")
    h = lax.conv_general_dilated(x, p["w1_t"], (1, 1), "VALID", dimension_numbers=dn)
    h = jnp.clip(_bn_nchw(h, *p["bn1"]), 0.0, 6.0)
    h = lax.conv_general_dilated(h, p["wdw_t"], (1, 1), ((1, 1), (1, 1)),
                                 dimension_numbers=dn, feature_group_count=cexp)
    h = jnp.clip(_bn_nchw(h, *p["bn2"]), 0.0, 6.0)
    h = lax.conv_general_dilated(h, p["w3_t"], (1, 1), "VALID", dimension_numbers=dn)
    h = _bn_nchw(h, *p["bn3"])
    r = lax.conv_general_dilated(x, p["wres_t"], (1, 1), "VALID", dimension_numbers=dn)
    r = _bn_nchw(r, *p["bnres"])
    return r + h


if __name__ == "__main__":
    N, Cin, H, W = 2, 4, 16, 16
    Cout, t_exp = 8, 6
    Cexp = Cin * t_exp

    key = jax.random.PRNGKey(0)
    kx, kp = jax.random.split(key)
    x = jax.random.normal(kx, (N, Cin, H, W), jnp.float32)   # NCHW like PyTorch

    params = make_params(kp, Cin, Cout, t_exp)
    folded = fold_params(params)

    out = inverted_residual_pallas(x, folded, block_h=8)
    out = jax.block_until_ready(out)

    ref = ref_forward(x, params, Cexp)
    err = float(jnp.max(jnp.abs(out - ref)))
    rel = float(jnp.linalg.norm(out - ref) / jnp.linalg.norm(ref))
    assert out.shape == (N, Cout, H, W), out.shape
    # Matmul inputs are bf16 (f32 accumulation); bounds leave ~3x margin over the
    # expected bf16 quantization error through the two chained matmuls.
    assert err < 2e-1, f"max abs error too large: {err} (rel {rel})"
    assert rel < 5e-2, f"relative error too large: {rel}"
    print("KERNEL_OK")
</pallas_src>

<mosaic_0001>
module attributes {stable_mosaic.version = 11 : i64} {
  func.func @kernel(%arg0: i32, %arg1: i32, %arg2: memref<1x288x4xbf16, #tpu.memory_space<vmem>>, %arg3: memref<4x32xbf16, #tpu.memory_space<vmem>>, %arg4: memref<1x24xf32, #tpu.memory_space<vmem>>, %arg5: memref<9x1x24xf32, #tpu.memory_space<vmem>>, %arg6: memref<1x24xf32, #tpu.memory_space<vmem>>, %arg7: memref<24x8xbf16, #tpu.memory_space<vmem>>, %arg8: memref<1x8xf32, #tpu.memory_space<vmem>>, %arg9: memref<1x128x8xf32, #tpu.memory_space<vmem>>) attributes {dimension_semantics = [#tpu.dimension_semantics<parallel>, #tpu.dimension_semantics<parallel>], iteration_bounds = array<i64: 2, 2>, scalar_prefetch = 0 : i64, scratch_operands = 0 : i64, tpu.core_type = #tpu.core_type<tc>, window_params = [{transform_indices = @transform_0, window_bounds = array<i64: 1, 288, 4>}, {pipeline_mode = #tpu.pipeline_mode<synchronous>, transform_indices = @transform_1, window_bounds = array<i64: 4, 32>}, {pipeline_mode = #tpu.pipeline_mode<synchronous>, transform_indices = @transform_2, window_bounds = array<i64: 1, 24>}, {pipeline_mode = #tpu.pipeline_mode<synchronous>, transform_indices = @transform_3, window_bounds = array<i64: 9, 1, 24>}, {pipeline_mode = #tpu.pipeline_mode<synchronous>, transform_indices = @transform_4, window_bounds = array<i64: 1, 24>}, {pipeline_mode = #tpu.pipeline_mode<synchronous>, transform_indices = @transform_5, window_bounds = array<i64: 24, 8>}, {pipeline_mode = #tpu.pipeline_mode<synchronous>, transform_indices = @transform_6, window_bounds = array<i64: 1, 8>}, {transform_indices = @transform_7, window_bounds = array<i64: 1, 128, 8>}]} {
    %c128_i32 = arith.constant 128 : i32
    %0 = arith.muli %arg1, %c128_i32 : i32
    %1 = tpu.assume_multiple %0, 128 : i32
    %c0 = arith.constant 0 : index
    %2 = arith.index_cast %1 : i32 to index
    %c0_0 = arith.constant 0 : index
    %3 = vector.load %arg2[%c0, %2, %c0_0] : memref<1x288x4xbf16, #tpu.memory_space<vmem>>, vector<1x160x4xbf16>
    %4 = vector.shape_cast %3 : vector<1x160x4xbf16> to vector<160x4xbf16>
    %c0_1 = arith.constant 0 : index
    %c0_2 = arith.constant 0 : index
    %5 = vector.load %arg3[%c0_1, %c0_2] : memref<4x32xbf16, #tpu.memory_space<vmem>>, vector<4x32xbf16>
    %cst = arith.constant dense<0.000000e+00> : vector<160x32xf32>
    %6 = tpu.matmul %4, %5, %cst {dimension_numbers = #tpu.dot_dimension_numbers<[1], [0], [0], [1], [0, 0, 1, 1], [], []>} : vector<160x4xbf16>, vector<4x32xbf16>, vector<160x32xf32> -> vector<160x32xf32>
    %7 = vector.extract_strided_slice %6 {offsets = [0, 0], sizes = [160, 24], strides = [1, 1]} : vector<160x32xf32> to vector<160x24xf32>
    %c0_3 = arith.constant 0 : index
    %c0_4 = arith.constant 0 : index
    %8 = vector.load %arg4[%c0_3, %c0_4] : memref<1x24xf32, #tpu.memory_space<vmem>>, vector<1x24xf32>
    %9 = vector.broadcast %8 : vector<1x24xf32> to vector<160x24xf32>
    %10 = arith.addf %7, %9 : vector<160x24xf32>
    %cst_5 = arith.constant 0.000000e+00 : f32
    %cst_6 = arith.constant 6.000000e+00 : f32
    %11 = vector.broadcast %cst_5 : f32 to vector<160x24xf32>
    %12 = arith.maximumf %11, %10 : vector<160x24xf32>
    %13 = vector.broadcast %cst_6 : f32 to vector<160x24xf32>
    %14 = arith.minimumf %13, %12 : vector<160x24xf32>
    %15 = vector.extract_strided_slice %6 {offsets = [0, 24], sizes = [160, 8], strides = [1, 1]} : vector<160x32xf32> to vector<160x8xf32>
    %16 = tpu.iota {dimensions = array<i32: 0>} : vector<160x1xi32>
    %c0_i32 = arith.constant 0 : i32
    %17 = arith.cmpi eq, %arg1, %c0_i32 : i32
    %c16_i32 = arith.constant 16 : i32
    %18 = vector.broadcast %c16_i32 : i32 to vector<160x1xi32>
    %19 = arith.cmpi slt, %16, %18 : vector<160x1xi32>
    %20 = vector.broadcast %17 : i1 to vector<160x1xi1>
    %21 = arith.andi %20, %19 : vector<160x1xi1>
    %c1_i32 = arith.constant 1 : i32
    %22 = arith.cmpi eq, %arg1, %c1_i32 : i32
    %c144_i32 = arith.constant 144 : i32
    %23 = vector.broadcast %c144_i32 : i32 to vector<160x1xi32>
    %24 = arith.cmpi sge, %16, %23 : vector<160x1xi32>
    %25 = vector.broadcast %22 : i1 to vector<160x1xi1>
    %26 = arith.andi %25, %24 : vector<160x1xi1>
    %27 = arith.ori %21, %26 : vector<160x1xi1>
    %cst_7 = arith.constant 0.000000e+00 : f32
    %28 = vector.shape_cast %27 : vector<160x1xi1> to vector<160x1xi1>
    %29 = vector.broadcast %28 : vector<160x1xi1> to vector<160x24xi1>
    %30 = vector.broadcast %cst_7 : f32 to vector<160x24xf32>
    %31 = arith.select %29, %30, %14 : vector<160x24xi1>, vector<160x24xf32>
    %c16_i32_8 = arith.constant 16 : i32
    %c0_i32_9 = arith.constant 0 : i32
    %32 = arith.cmpi eq, %c16_i32_8, %c0_i32_9 : i32
    %c1_i32_10 = arith.constant 1 : i32
    %33 = arith.select %32, %c1_i32_10, %c16_i32_8 : i32
    %34 = vector.broadcast %33 : i32 to vector<160x1xi32>
    %35 = arith.remsi %16, %34 : vector<160x1xi32>
    %c0_i32_11 = arith.constant 0 : i32
    %36 = vector.broadcast %c0_i32_11 : i32 to vector<160x1xi32>
    %37 = arith.cmpi ne, %35, %36 : vector<160x1xi32>
    %c0_i32_12 = arith.constant 0 : i32
    %38 = vector.broadcast %c0_i32_12 : i32 to vector<160x1xi32>
    %39 = arith.cmpi slt, %35, %38 : vector<160x1xi32>
    %c0_i32_13 = arith.constant 0 : i32
    %40 = arith.cmpi slt, %33, %c0_i32_13 : i32
    %41 = vector.broadcast %40 : i1 to vector<160x1xi1>
    %42 = vector.broadcast %41 : vector<160x1xi1> to vector<160x1xi1>
    %43 = arith.xori %39, %42 : vector<160x1xi1>
    %44 = arith.andi %43, %37 : vector<160x1xi1>
    %45 = vector.broadcast %33 : i32 to vector<160x1xi32>
    %46 = arith.addi %35, %45 : vector<160x1xi32>
    %47 = arith.select %44, %46, %35 : vector<160x1xi1>, vector<160x1xi32>
    %cst_14 = arith.constant 0.000000e+00 : f32
    %48 = vector.broadcast %cst_14 : f32 to vector<1x24xf32>
    %49 = vector.extract_strided_slice %31 {offsets = [1, 0], sizes = [159, 24], strides = [1, 1]} : vector<160x24xf32> to vector<159x24xf32>
    %50 = tpu.concatenate %49, %48 in 0 : vector<159x24xf32>, vector<1x24xf32> -> vector<160x24xf32>
    %51 = vector.extract_strided_slice %31 {offsets = [0, 0], sizes = [159, 24], strides = [1, 1]} : vector<160x24xf32> to vector<159x24xf32>
    %52 = tpu.concatenate %48, %51 in 0 : vector<1x24xf32>, vector<159x24xf32> -> vector<160x24xf32>
    %c15_i32 = arith.constant 15 : i32
    %53 = vector.broadcast %c15_i32 : i32 to vector<160x1xi32>
    %54 = arith.cmpi slt, %47, %53 : vector<160x1xi32>
    %cst_15 = arith.constant 0.000000e+00 : f32
    %55 = vector.shape_cast %54 : vector<160x1xi1> to vector<160x1xi1>
    %56 = vector.broadcast %55 : vector<160x1xi1> to vector<160x24xi1>
    %57 = vector.broadcast %cst_15 : f32 to vector<160x24xf32>
    %58 = arith.select %56, %50, %57 : vector<160x24xi1>, vector<160x24xf32>
    %c0_i32_16 = arith.constant 0 : i32
    %59 = vector.broadcast %c0_i32_16 : i32 to vector<160x1xi32>
    %60 = arith.cmpi sgt, %47, %59 : vector<160x1xi32>
    %cst_17 = arith.constant 0.000000e+00 : f32
    %61 = vector.shape_cast %60 : vector<160x1xi1> to vector<160x1xi1>
    %62 = vector.broadcast %61 : vector<160x1xi1> to vector<160x24xi1>
    %63 = vector.broadcast %cst_17 : f32 to vector<160x24xf32>
    %64 = arith.select %62, %52, %63 : vector<160x24xi1>, vector<160x24xf32>
    %65 = vector.extract_strided_slice %64 {offsets = [0, 0], sizes = [128, 24], strides = [1, 1]} : vector<160x24xf32> to vector<128x24xf32>
    %c0_18 = arith.constant 0 : index
    %c0_19 = arith.constant 0 : index
    %c0_20 = arith.constant 0 : index
    %66 = vector.load %arg5[%c0_18, %c0_19, %c0_20] : memref<9x1x24xf32, #tpu.memory_space<vmem>>, vector<1x1x24xf32>
    %67 = vector.shape_cast %66 : vector<1x1x24xf32> to vector<1x24xf32>
    %68 = vector.broadcast %67 : vector<1x24xf32> to vector<128x24xf32>
    %69 = arith.mulf %65, %68 : vector<128x24xf32>
    %70 = vector.extract_strided_slice %31 {offsets = [0, 0], sizes = [128, 24], strides = [1, 1]} : vector<160x24xf32> to vector<128x24xf32>
    %c1 = arith.constant 1 : index
    %c0_21 = arith.constant 0 : index
    %c0_22 = arith.constant 0 : index
    %71 = vector.load %arg5[%c1, %c0_21, %c0_22] : memref<9x1x24xf32, #tpu.memory_space<vmem>>, vector<1x1x24xf32>
    %72 = vector.shape_cast %71 : vector<1x1x24xf32> to vector<1x24xf32>
    %73 = vector.broadcast %72 : vector<1x24xf32> to vector<128x24xf32>
    %74 = arith.mulf %70, %73 : vector<128x24xf32>
    %75 = arith.addf %69, %74 : vector<128x24xf32>
    %76 = vector.extract_strided_slice %58 {offsets = [0, 0], sizes = [128, 24], strides = [1, 1]} : vector<160x24xf32> to vector<128x24xf32>
    %c2 = arith.constant 2 : index
    %c0_23 = arith.constant 0 : index
    %c0_24 = arith.constant 0 : index
    %77 = vector.load %arg5[%c2, %c0_23, %c0_24] : memref<9x1x24xf32, #tpu.memory_space<vmem>>, vector<1x1x24xf32>
    %78 = vector.shape_cast %77 : vector<1x1x24xf32> to vector<1x24xf32>
    %79 = vector.broadcast %78 : vector<1x24xf32> to vector<128x24xf32>
    %80 = arith.mulf %76, %79 : vector<128x24xf32>
    %81 = arith.addf %75, %80 : vector<128x24xf32>
    %82 = vector.extract_strided_slice %64 {offsets = [16, 0], sizes = [128, 24], strides = [1, 1]} : vector<160x24xf32> to vector<128x24xf32>
    %c3 = arith.constant 3 : index
    %c0_25 = arith.constant 0 : index
    %c0_26 = arith.constant 0 : index
    %83 = vector.load %arg5[%c3, %c0_25, %c0_26] : memref<9x1x24xf32, #tpu.memory_space<vmem>>, vector<1x1x24xf32>
    %84 = vector.shape_cast %83 : vector<1x1x24xf32> to vector<1x24xf32>
    %85 = vector.broadcast %84 : vector<1x24xf32> to vector<128x24xf32>
    %86 = arith.mulf %82, %85 : vector<128x24xf32>
    %87 = arith.addf %81, %86 : vector<128x24xf32>
    %88 = vector.extract_strided_slice %31 {offsets = [16, 0], sizes = [128, 24], strides = [1, 1]} : vector<160x24xf32> to vector<128x24xf32>
    %c4 = arith.constant 4 : index
    %c0_27 = arith.constant 0 : index
    %c0_28 = arith.constant 0 : index
    %89 = vector.load %arg5[%c4, %c0_27, %c0_28] : memref<9x1x24xf32, #tpu.memory_space<vmem>>, vector<1x1x24xf32>
    %90 = vector.shape_cast %89 : vector<1x1x24xf32> to vector<1x24xf32>
    %91 = vector.broadcast %90 : vector<1x24xf32> to vector<128x24xf32>
    %92 = arith.mulf %88, %91 : vector<128x24xf32>
    %93 = arith.addf %87, %92 : vector<128x24xf32>
    %94 = vector.extract_strided_slice %58 {offsets = [16, 0], sizes = [128, 24], strides = [1, 1]} : vector<160x24xf32> to vector<128x24xf32>
    %c5 = arith.constant 5 : index
    %c0_29 = arith.constant 0 : index
    %c0_30 = arith.constant 0 : index
    %95 = vector.load %arg5[%c5, %c0_29, %c0_30] : memref<9x1x24xf32, #tpu.memory_space<vmem>>, vector<1x1x24xf32>
    %96 = vector.shape_cast %95 : vector<1x1x24xf32> to vector<1x24xf32>
    %97 = vector.broadcast %96 : vector<1x24xf32> to vector<128x24xf32>
    %98 = arith.mulf %94, %97 : vector<128x24xf32>
    %99 = arith.addf %93, %98 : vector<128x24xf32>
    %100 = vector.extract_strided_slice %64 {offsets = [32, 0], sizes = [128, 24], strides = [1, 1]} : vector<160x24xf32> to vector<128x24xf32>
    %c6 = arith.constant 6 : index
    %c0_31 = arith.constant 0 : index
    %c0_32 = arith.constant 0 : index
    %101 = vector.load %arg5[%c6, %c0_31, %c0_32] : memref<9x1x24xf32, #tpu.memory_space<vmem>>, vector<1x1x24xf32>
    %102 = vector.shape_cast %101 : vector<1x1x24xf32> to vector<1x24xf32>
    %103 = vector.broadcast %102 : vector<1x24xf32> to vector<128x24xf32>
    %104 = arith.mulf %100, %103 : vector<128x24xf32>
    %105 = arith.addf %99, %104 : vector<128x24xf32>
    %106 = vector.extract_strided_slice %31 {offsets = [32, 0], sizes = [128, 24], strides = [1, 1]} : vector<160x24xf32> to vector<128x24xf32>
    %c7 = arith.constant 7 : index
    %c0_33 = arith.constant 0 : index
    %c0_34 = arith.constant 0 : index
    %107 = vector.load %arg5[%c7, %c0_33, %c0_34] : memref<9x1x24xf32, #tpu.memory_space<vmem>>, vector<1x1x24xf32>
    %108 = vector.shape_cast %107 : vector<1x1x24xf32> to vector<1x24xf32>
    %109 = vector.broadcast %108 : vector<1x24xf32> to vector<128x24xf32>
    %110 = arith.mulf %106, %109 : vector<128x24xf32>
    %111 = arith.addf %105, %110 : vector<128x24xf32>
    %112 = vector.extract_strided_slice %58 {offsets = [32, 0], sizes = [128, 24], strides = [1, 1]} : vector<160x24xf32> to vector<128x24xf32>
    %c8 = arith.constant 8 : index
    %c0_35 = arith.constant 0 : index
    %c0_36 = arith.constant 0 : index
    %113 = vector.load %arg5[%c8, %c0_35, %c0_36] : memref<9x1x24xf32, #tpu.memory_space<vmem>>, vector<1x1x24xf32>
    %114 = vector.shape_cast %113 : vector<1x1x24xf32> to vector<1x24xf32>
    %115 = vector.broadcast %114 : vector<1x24xf32> to vector<128x24xf32>
    %116 = arith.mulf %112, %115 : vector<128x24xf32>
    %117 = arith.addf %111, %116 : vector<128x24xf32>
    %c0_37 = arith.constant 0 : index
    %c0_38 = arith.constant 0 : index
    %118 = vector.load %arg6[%c0_37, %c0_38] : memref<1x24xf32, #tpu.memory_space<vmem>>, vector<1x24xf32>
    %119 = vector.broadcast %118 : vector<1x24xf32> to vector<128x24xf32>
    %120 = arith.addf %117, %119 : vector<128x24xf32>
    %cst_39 = arith.constant 0.000000e+00 : f32
    %cst_40 = arith.constant 6.000000e+00 : f32
    %121 = vector.broadcast %cst_39 : f32 to vector<128x24xf32>
    %122 = arith.maximumf %121, %120 : vector<128x24xf32>
    %123 = vector.broadcast %cst_40 : f32 to vector<128x24xf32>
    %124 = arith.minimumf %123, %122 : vector<128x24xf32>
    %125 = arith.truncf %124 : vector<128x24xf32> to vector<128x24xbf16>
    %c0_41 = arith.constant 0 : index
    %c0_42 = arith.constant 0 : index
    %126 = vector.load %arg7[%c0_41, %c0_42] : memref<24x8xbf16, #tpu.memory_space<vmem>>, vector<24x8xbf16>
    %cst_43 = arith.constant dense<0.000000e+00> : vector<128x8xf32>
    %127 = tpu.matmul %125, %126, %cst_43 {dimension_numbers = #tpu.dot_dimension_numbers<[1], [0], [0], [1], [0, 0, 1, 1], [], []>} : vector<128x24xbf16>, vector<24x8xbf16>, vector<128x8xf32> -> vector<128x8xf32>
    %128 = vector.extract_strided_slice %15 {offsets = [16, 0], sizes = [128, 8], strides = [1, 1]} : vector<160x8xf32> to vector<128x8xf32>
    %129 = arith.addf %127, %128 : vector<128x8xf32>
    %c0_44 = arith.constant 0 : index
    %c0_45 = arith.constant 0 : index
    %130 = vector.load %arg8[%c0_44, %c0_45] : memref<1x8xf32, #tpu.memory_space<vmem>>, vector<1x8xf32>
    %131 = vector.broadcast %130 : vector<1x8xf32> to vector<128x8xf32>
    %132 = arith.addf %129, %131 : vector<128x8xf32>
    %c0_46 = arith.constant 0 : index
    %c0_47 = arith.constant 0 : index
    %c0_48 = arith.constant 0 : index
    %133 = vector.load %arg9[%c0_46, %c0_47, %c0_48] : memref<1x128x8xf32, #tpu.memory_space<vmem>>, vector<1x128x8xf32>
    %134 = vector.shape_cast %133 : vector<1x128x8xf32> to vector<128x8xf32>
    %135 = vector.shape_cast %132 : vector<128x8xf32> to vector<1x128x8xf32>
    tpu.vector_store %arg9[%c0_46, %c0_47, %c0_48], %135 {strides = array<i32>} : memref<1x128x8xf32, #tpu.memory_space<vmem>>, vector<1x128x8xf32>,
    return
  }
  func.func @transform_0(%arg0: i32, %arg1: i32) -> (i32, i32, i32) {
    %c0_i32 = arith.constant 0 : i32
    %c0_i32_0 = arith.constant 0 : i32
    %c0_i32_1 = arith.constant 0 : i32
    return %arg0, %c0_i32, %c0_i32_0 : i32, i32, i32
  }
  func.func @transform_1(%arg0: i32, %arg1: i32) -> (i32, i32) {
    %c0_i32 = arith.constant 0 : i32
    %c0_i32_0 = arith.constant 0 : i32
    %c0_i32_1 = arith.constant 0 : i32
    return %c0_i32, %c0_i32_0 : i32, i32
  }
  func.func @transform_2(%arg0: i32, %arg1: i32) -> (i32, i32) {
    %c0_i32 = arith.constant 0 : i32
    %c0_i32_0 = arith.constant 0 : i32
    %c0_i32_1 = arith.constant 0 : i32
    return %c0_i32, %c0_i32_0 : i32, i32
  }
  func.func @transform_3(%arg0: i32, %arg1: i32) -> (i32, i32, i32) {
    %c0_i32 = arith.constant 0 : i32
    %c0_i32_0 = arith.constant 0 : i32
    %c0_i32_1 = arith.constant 0 : i32
    %c0_i32_2 = arith.constant 0 : i32
    return %c0_i32, %c0_i32_0, %c0_i32_1 : i32, i32, i32
  }
  func.func @transform_4(%arg0: i32, %arg1: i32) -> (i32, i32) {
    %c0_i32 = arith.constant 0 : i32
    %c0_i32_0 = arith.constant 0 : i32
    %c0_i32_1 = arith.constant 0 : i32
    return %c0_i32, %c0_i32_0 : i32, i32
  }
  func.func @transform_5(%arg0: i32, %arg1: i32) -> (i32, i32) {
    %c0_i32 = arith.constant 0 : i32
    %c0_i32_0 = arith.constant 0 : i32
    %c0_i32_1 = arith.constant 0 : i32
    return %c0_i32, %c0_i32_0 : i32, i32
  }
  func.func @transform_6(%arg0: i32, %arg1: i32) -> (i32, i32) {
    %c0_i32 = arith.constant 0 : i32
    %c0_i32_0 = arith.constant 0 : i32
    %c0_i32_1 = arith.constant 0 : i32
    return %c0_i32, %c0_i32_0 : i32, i32
  }
  func.func @transform_7(%arg0: i32, %arg1: i32) -> (i32, i32, i32) {
    %c0_i32 = arith.constant 0 : i32
    %c0_i32_0 = arith.constant 0 : i32
    return %arg0, %arg1, %c0_i32 : i32, i32, i32
  }
}

</mosaic_0001>

<llo_original>
// kernel: tpu_custom_call.1
$region0: #{tpu_custom_call.1}
  #allocation0 [shape = 'u32[]', space=smem, size = 0x4, offset = 0x4, fixed_abs, tag = 'smem constant byte address 0x4 - core index']
  #allocation1 [shape = 'u32[144,128]{1,0:T(1,128)}', space=vmem, size = 0x12000, scoped, tag = 'internal scratch']
  %s0 = inlined_call_operand.vmem [shape: bf16[2,288,4], index: 0, kind: input, shape index: {}]
  %s1 = inlined_call_operand.vmem [shape: bf16[4,32], index: 1, kind: input, shape index: {}]
  %s2 = inlined_call_operand.vmem [shape: f32[1,24], index: 2, kind: input, shape index: {}]
  %s3 = inlined_call_operand.vmem [shape: f32[9,1,24], index: 3, kind: input, shape index: {}]
  %s4 = inlined_call_operand.vmem [shape: f32[1,24], index: 4, kind: input, shape index: {}]
  %s5 = inlined_call_operand.vmem [shape: bf16[24,8], index: 5, kind: input, shape index: {}]
  %s6 = inlined_call_operand.vmem [shape: f32[1,8], index: 6, kind: input, shape index: {}]
  %s7 = inlined_call_operand.vmem [shape: f32[2,256,8], index: 7, kind: output, shape index: {}]
  %s8 = sld [smem:[#allocation0]]
  $region61: #{tpu_custom_call.1} parent=0
    _
  %s10 = ssub.s32 1, %s8
  %s11 = scalar_select 0, %s10, %s8
  loop: start=0, step=1, limit=6
  $region2: #{tpu_custom_call.1} parent=0 // loop_pre_header
    _
  $region3: #{tpu_custom_call.1} parent=0 // loop_header
    %s13 = sphi 0, %s17
    %p14 = scmp.ge.s32.totalorder %s13, 6
    %s20 = sphi 0, %s32
    %s21 = sphi 0, %s28
    %s22 = sphi 0, %s20
    %s23 = sphi 0, %s21
    %s24 = sphi 0, %s22
    %s25 = sphi 0, %s23
    %s35 = sphi 0, %s37
    %s38 = sphi 0, %s35
    %s39 = sphi 0, %s38
    %s55 = sphi 0, %s39
    %s59 = sphi 0, %s59
    %s61 = sphi 0, %s59
    %s62 = sphi 0, %s61
    %s76 = sphi 0, %s62
    %s80 = sphi 0, %s80
    %s82 = sphi 0, %s80
    %s83 = sphi 0, %s82
    %s97 = sphi 0, %s83
    %s101 = sphi 0, %s101
    %s103 = sphi 0, %s101
    %s104 = sphi 0, %s103
    %s118 = sphi 0, %s104
    %s122 = sphi 0, %s122
    %s124 = sphi 0, %s122
    %s125 = sphi 0, %s124
    %s139 = sphi 0, %s125
    %s143 = sphi 0, %s143
    %s145 = sphi 0, %s143
    %s146 = sphi 0, %s145
    %s160 = sphi 0, %s146
    %s164 = sphi 0, %s164
    %s166 = sphi 0, %s164
    %s167 = sphi 0, %s166
    %s181 = sphi 0, %s167
    %s189 = sphi 0, %s191
    %s192 = sphi 0, %s189
    %s193 = sphi 0, %s192
    %s209 = sphi 0, %s193
  $region4: #{tpu_custom_call.1} parent=0 // loop_header_branch
    %16 = sbr.rel (%p14) target = $region8
  $region5: #{tpu_custom_call.1} parent=0 // loop_body
    %s18 = ssub.s32 %s13, 1
    %s19 = ssub.s32 %s13, 2
    %s26 = sadd.s32 1, %s21
    %p27 = scmp.ge.s32.totalorder %s26, 2
    %s28 = scalar_select %p27, 0, %s26
    %s29 = sadd.s32 1, %s20
    %s30 = scalar_select %p27, %s29, %s20
    %p31 = scmp.ge.s32.totalorder %s30, 2
    %s32 = scalar_select %p31, 0, %s30
    %s33 = ssub.s32 %s20, %s32
    %p34 = scmp.eq.s32.totalorder %s33, 0
    %s36 = sadd.s32 %s35, 1
    %s37 = scalar_select %p34, %s35, %s36
    %p40 = pneg %p34
    %p41 = scmp.eq.s32.totalorder %s13, 3
    %p42 = por %p40, %p41
    %p43 = scmp.ne.s32.totalorder %s35, %s38
    %p44 = scmp.eq.s32.totalorder %s13, 0
    %p45 = por %p43, %p44
    %p46 = scmp.ne.s32.totalorder %s35, %s38
    %p47 = scmp.eq.s32.totalorder %s18, 3
    %p48 = por %p46, %p47
    %p49 = scmp.ne.s32.totalorder %s38, %s39
    %p50 = scmp.eq.s32.totalorder %s18, 0
    %p51 = por %p49, %p50
    %p52 = scmp.ne.s32.totalorder %s38, %s39
    %p53 = scmp.eq.s32.totalorder %s19, 3
    %p54 = por %p52, %p53
    %p56 = scmp.ne.s32.totalorder %s39, %s55
    %p57 = scmp.eq.s32.totalorder %s19, 0
    %p58 = por %p56, %p57
    %s60 = sadd.s32 %s59, 1
    %p63 = scmp.eq.s32.totalorder %s13, 3
    %p64 = scmp.ne.s32.totalorder %s59, %s61
    %p65 = scmp.eq.s32.totalorder %s13, 0
    %p66 = por %p64, %p65
    %p67 = scmp.ne.s32.totalorder %s59, %s61
    %p68 = scmp.eq.s32.totalorder %s18, 3
    %p69 = por %p67, %p68
    %p70 = scmp.ne.s32.totalorder %s61, %s62
    %p71 = scmp.eq.s32.totalorder %s18, 0
    %p72 = por %p70, %p71
    %p73 = scmp.ne.s32.totalorder %s61, %s62
    %p74 = scmp.eq.s32.totalorder %s19, 3
    %p75 = por %p73, %p74
    %p77 = scmp.ne.s32.totalorder %s62, %s76
    %p78 = scmp.eq.s32.totalorder %s19, 0
    %p79 = por %p77, %p78
    %s81 = sadd.s32 %s80, 1
    %p84 = scmp.eq.s32.totalorder %s13, 3
    %p85 = scmp.ne.s32.totalorder %s80, %s82
    %p86 = scmp.eq.s32.totalorder %s13, 0
    %p87 = por %p85, %p86
    %p88 = scmp.ne.s32.totalorder %s80, %s82
    %p89 = scmp.eq.s32.totalorder %s18, 3
    %p90 = por %p88, %p89
    %p91 = scmp.ne.s32.totalorder %s82, %s83
    %p92 = scmp.eq.s32.totalorder %s18, 0
    %p93 = por %p91, %p92
    %p94 = scmp.ne.s32.totalorder %s82, %s83
    %p95 = scmp.eq.s32.totalorder %s19, 3
    %p96 = por %p94, %p95
    %p98 = scmp.ne.s32.totalorder %s83, %s97
    %p99 = scmp.eq.s32.totalorder %s19, 0
    %p100 = por %p98, %p99
    %s102 = sadd.s32 %s101, 1
    %p105 = scmp.eq.s32.totalorder %s13, 3
    %p106 = scmp.ne.s32.totalorder %s101, %s103
    %p107 = scmp.eq.s32.totalorder %s13, 0
    %p108 = por %p106, %p107
    %p109 = scmp.ne.s32.totalorder %s101, %s103
    %p110 = scmp.eq.s32.totalorder %s18, 3
    %p111 = por %p109, %p110
    %p112 = scmp.ne.s32.totalorder %s103, %s104
    %p113 = scmp.eq.s32.totalorder %s18, 0
    %p114 = por %p112, %p113
    %p115 = scmp.ne.s32.totalorder %s103, %s104
    %p116 = scmp.eq.s32.totalorder %s19, 3
    %p117 = por %p115, %p116
    %p119 = scmp.ne.s32.totalorder %s104, %s118
    %p120 = scmp.eq.s32.totalorder %s19, 0
    %p121 = por %p119, %p120
    %s123 = sadd.s32 %s122, 1
    %p126 = scmp.eq.s32.totalorder %s13, 3
    %p127 = scmp.ne.s32.totalorder %s122, %s124
    %p128 = scmp.eq.s32.totalorder %s13, 0
    %p129 = por %p127, %p128
    %p130 = scmp.ne.s32.totalorder %s122, %s124
    %p131 = scmp.eq.s32.totalorder %s18, 3
    %p132 = por %p130, %p131
    %p133 = scmp.ne.s32.totalorder %s124, %s125
    %p134 = scmp.eq.s32.totalorder %s18, 0
    %p135 = por %p133, %p134
    %p136 = scmp.ne.s32.totalorder %s124, %s125
    %p137 = scmp.eq.s32.totalorder %s19, 3
    %p138 = por %p136, %p137
    %p140 = scmp.ne.s32.totalorder %s125, %s139
    %p141 = scmp.eq.s32.totalorder %s19, 0
    %p142 = por %p140, %p141
    %s144 = sadd.s32 %s143, 1
    %p147 = scmp.eq.s32.totalorder %s13, 3
    %p148 = scmp.ne.s32.totalorder %s143, %s145
    %p149 = scmp.eq.s32.totalorder %s13, 0
    %p150 = por %p148, %p149
    %p151 = scmp.ne.s32.totalorder %s143, %s145
    %p152 = scmp.eq.s32.totalorder %s18, 3
    %p153 = por %p151, %p152
    %p154 = scmp.ne.s32.totalorder %s145, %s146
    %p155 = scmp.eq.s32.totalorder %s18, 0
    %p156 = por %p154, %p155
    %p157 = scmp.ne.s32.totalorder %s145, %s146
    %p158 = scmp.eq.s32.totalorder %s19, 3
    %p159 = por %p157, %p158
    %p161 = scmp.ne.s32.totalorder %s146, %s160
    %p162 = scmp.eq.s32.totalorder %s19, 0
    %p163 = por %p161, %p162
    %s165 = sadd.s32 %s164, 1
    %p168 = scmp.eq.s32.totalorder %s13, 3
    %p169 = scmp.ne.s32.totalorder %s164, %s166
    %p170 = scmp.eq.s32.totalorder %s13, 0
    %p171 = por %p169, %p170
    %p172 = scmp.ne.s32.totalorder %s164, %s166
    %p173 = scmp.eq.s32.totalorder %s18, 3
    %p174 = por %p172, %p173
    %p175 = scmp.ne.s32.totalorder %s166, %s167
    %p176 = scmp.eq.s32.totalorder %s18, 0
    %p177 = por %p175, %p176
    %p178 = scmp.ne.s32.totalorder %s166, %s167
    %p179 = scmp.eq.s32.totalorder %s19, 3
    %p180 = por %p178, %p179
    %p182 = scmp.ne.s32.totalorder %s167, %s181
    %p183 = scmp.eq.s32.totalorder %s19, 0
    %p184 = por %p182, %p183
    %s185 = ssub.s32 %s20, %s32
    %s186 = ssub.s32 %s21, %s28
    %s187 = sor.u32 %s185, %s186
    %p188 = scmp.eq.s32.totalorder %s187, 0
    %s190 = sadd.s32 %s189, 1
    %s191 = scalar_select %p188, %s189, %s190
    %p194 = pneg %p188
    %p195 = scmp.eq.s32.totalorder %s13, 3
    %p196 = por %p194, %p195
    %p197 = scmp.ne.s32.totalorder %s189, %s192
    %p198 = scmp.eq.s32.totalorder %s13, 0
    %p199 = por %p197, %p198
    %p200 = scmp.ne.s32.totalorder %s189, %s192
    %p201 = scmp.eq.s32.totalorder %s18, 3
    %p202 = por %p200, %p201
    %p203 = scmp.ne.s32.totalorder %s192, %s193
    %p204 = scmp.eq.s32.totalorder %s18, 0
    %p205 = por %p203, %p204
    %p206 = scmp.ne.s32.totalorder %s192, %s193
    %p207 = scmp.eq.s32.totalorder %s19, 3
    %p208 = por %p206, %p207
    %p210 = scmp.ne.s32.totalorder %s193, %s209
    %p211 = scmp.eq.s32.totalorder %s19, 0
    %p212 = por %p210, %p211
    %p213 = scmp.le.s32.totalorder 1, %s13
    %p214 = scmp.lt.s32.totalorder %s13, 5
    %p215 = pnand %p213, %p214
    %p216 = pneg %p215
    // Predicated region
    $region9: #{tpu_custom_call.1} parent=5 // pred_check
      _
    $region10: #{tpu_custom_call.1} parent=5 // pred_check_branch
      %218 = sbr.rel (%p215) target = $region12
    $region11: #{tpu_custom_call.1} parent=5 // pred_region
      %s219 = ssub.s32 %s13, 1
      // Predicated region
      $region13: #{tpu_custom_call.1} parent=11 // pred_check
        %p220 = pneg %p72
      $region14: #{tpu_custom_call.1} parent=11 // pred_check_branch
        %222 = sbr.rel (%p220) target = $region16
      $region15: #{tpu_custom_call.1} parent=11 // pred_region
        _
      $region16: #{tpu_custom_call.1} parent=11 // pred_fallthru
        _
      // Predicated region
      $region17: #{tpu_custom_call.1} parent=11 // pred_check
        %p223 = pneg %p93
      $region18: #{tpu_custom_call.1} parent=11 // pred_check_branch
        %225 = sbr.rel (%p223) target = $region20
      $region19: #{tpu_custom_call.1} parent=11 // pred_region
        _
      $region20: #{tpu_custom_call.1} parent=11 // pred_fallthru
        _
      // Predicated region
      $region21: #{tpu_custom_call.1} parent=11 // pred_check
        %p226 = pneg %p114
      $region22: #{tpu_custom_call.1} parent=11 // pred_check_branch
        %228 = sbr.rel (%p226) target = $region24
      $region23: #{tpu_custom_call.1} parent=11 // pred_region
        _
      $region24: #{tpu_custom_call.1} parent=11 // pred_fallthru
        _
      // Predicated region
      $region25: #{tpu_custom_call.1} parent=11 // pred_check
        %p229 = pneg %p135
      $region26: #{tpu_custom_call.1} parent=11 // pred_check_branch
        %231 = sbr.rel (%p229) target = $region28
      $region27: #{tpu_custom_call.1} parent=11 // pred_region
        _
      $region28: #{tpu_custom_call.1} parent=11 // pred_fallthru
        _
      // Predicated region
      $region29: #{tpu_custom_call.1} parent=11 // pred_check
        %p232 = pneg %p156
      $region30: #{tpu_custom_call.1} parent=11 // pred_check_branch
        %234 = sbr.rel (%p232) target = $region32
      $region31: #{tpu_custom_call.1} parent=11 // pred_region
        _
      $region32: #{tpu_custom_call.1} parent=11 // pred_fallthru
        _
      // Predicated region
      $region33: #{tpu_custom_call.1} parent=11 // pred_check
        %p235 = pneg %p177
      $region34: #{tpu_custom_call.1} parent=11 // pred_check_branch
        %237 = sbr.rel (%p235) target = $region36
      $region35: #{tpu_custom_call.1} parent=11 // pred_region
        _
      $region36: #{tpu_custom_call.1} parent=11 // pred_fallthru
        _
    $region12: #{tpu_custom_call.1} parent=5 // pred_fallthru
      _
    %p238 = scmp.lt.s32.totalorder %s13, 4
    // Predicated region
    $region37: #{tpu_custom_call.1} parent=5 // pred_check
      %p239 = pneg %p238
    $region38: #{tpu_custom_call.1} parent=5 // pred_check_branch
      %241 = sbr.rel (%p239) target = $region40
    $region39: #{tpu_custom_call.1} parent=5 // pred_region
      // Predicated region
      $region41: #{tpu_custom_call.1} parent=39 // pred_check
        %p242 = pneg %p45
      $region42: #{tpu_custom_call.1} parent=39 // pred_check_branch
        %244 = sbr.rel (%p242) target = $region44
      $region43: #{tpu_custom_call.1} parent=39 // pred_region
        %p245 = scmp.lt.s32.totalorder %s20, 1
        %s246 = scalar_select %p245, %s20, 1
        %s247 = smul.addr %s246, 36
        %s248 = smul.addr %s247, 4
        %s249 = scalar_lea.vmem %s0, %s248
      $region44: #{tpu_custom_call.1} parent=39 // pred_fallthru
        _
    $region40: #{tpu_custom_call.1} parent=5 // pred_fallthru
      _
    %p250 = scmp.le.s32.totalorder 1, %s13
    %p251 = scmp.lt.s32.totalorder %s13, 5
    %p252 = pnand %p250, %p251
    %p253 = pneg %p252
    // Predicated region
    $region45: #{tpu_custom_call.1} parent=5 // pred_check
      _
    $region46: #{tpu_custom_call.1} parent=5 // pred_check_branch
      %255 = sbr.rel (%p252) target = $region48
    $region47: #{tpu_custom_call.1} parent=5 // pred_region
      %s256 = ssub.s32 %s13, 1
      %p257 = scmp.lt.s32.totalorder %s22, 1
      %s258 = scalar_select %p257, %s22, 1
      %s259 = smul.addr %s258, 36
      %s260 = smul.addr %s259, 4
      %s261 = scalar_lea.vmem %s0, %s260
      %p262 = pneg %p51
      %p263 = pneg %p48
      %p264 = pneg %p72
      %p265 = pneg %p69
      %p266 = pneg %p93
      %p267 = pneg %p90
      %p268 = pneg %p114
      %p269 = pneg %p111
      %p270 = pneg %p135
      %p271 = pneg %p132
      %p272 = pneg %p156
      %p273 = pneg %p153
      %p274 = pneg %p177
      %p275 = pneg %p174
      %p276 = pneg %p205
      %p277 = pneg %p202
      %s278 = smul.u32 16, %s23
      %p279 = scmp.lt.s32.totalorder %s22, 1
      %s280 = scalar_select %p279, %s22, 1
      %p281 = scmp.lt.s32.totalorder %s278, 31
      %s282 = scalar_select %p281, %s278, 31
      %s283 = smul.addr %s280, 32
      %s284 = sadd.s32 %s282, %s283
      %s285 = smul.addr %s284, 8
      %s286 = scalar_lea.vmem %s7, %s285
      %p287 = scmp.lt.s32.totalorder %s22, 1
      %s288 = scalar_select %p287, %s22, 1
      %s289 = smul.addr %s288, 36
      %s290 = smul.addr %s289, 4
      %s291 = scalar_lea.vmem %s0, %s290
      %s292 = smul.u32 16, %s23
      %p293 = scmp.lt.s32.totalorder %s22, 1
      %s294 = scalar_select %p293, %s22, 1
      %p295 = scmp.lt.s32.totalorder %s292, 31
      %s296 = scalar_select %p295, %s292, 31
      %s297 = smul.addr %s294, 32
      %s298 = sadd.s32 %s296, %s297
      %s299 = smul.addr %s298, 8
      %s300 = scalar_lea.vmem %s7, %s299
      %s301 = smul.u32 16, %s23
      %s303 = smul.u32 %s23, 128
      %s304 = sshra.s32 %s303, 3
      %s305 = sand.u32 %s303, 7
      %s306 = smul.addr %s304, 4
      %s307 = scalar_lea.vmem %s291, %s306
      %v308 = vld [vmem:[%s307] sm:$0xf]
      %v309 = vld [vmem:[%s307 + $0x4] sm:$0xf]
      %v310 = vld [vmem:[%s307 + $0x8] sm:$0xf]
      %v311 = vld [vmem:[%s307 + $0xc] sm:$0xf]
      %v312 = vld [vmem:[%s307 + $0x10] sm:$0xf]
      %v313 = vld [vmem:[%s307 + $0x14] sm:$0xf]
      %v314 = vld [vmem:[%s307 + $0x18] sm:$0xf]
      %v315 = vld [vmem:[%s307 + $0x1c] sm:$0xf]
      %v316 = vld [vmem:[%s307 + $0x20] sm:$0xf]
      %v317 = vld [vmem:[%s307 + $0x24] sm:$0xf]
      %v318 = vld [vmem:[%s307 + $0x28] sm:$0xf]
      %v319 = vld [vmem:[%s307 + $0x2c] sm:$0xf]
      %v320 = vld [vmem:[%s307 + $0x30] sm:$0xf]
      %v321 = vld [vmem:[%s307 + $0x34] sm:$0xf]
      %v322 = vld [vmem:[%s307 + $0x38] sm:$0xf]
      %v323 = vld [vmem:[%s307 + $0x3c] sm:$0xf]
      %v324 = vld [vmem:[%s307 + $0x40] sm:$0xf]
      %v325 = vld [vmem:[%s307 + $0x44] sm:$0xf]
      %v326 = vld [vmem:[%s307 + $0x48] sm:$0xf]
      %v327 = vld [vmem:[%s307 + $0x4c] sm:$0xf]
      %v328 = vld [vmem:[%s1] sm:$0x3]
      %v349 = vunpack.c.l.b16 %v308
      %v350 = vunpack.c.l.b16 %v309
      %v351 = vunpack.c.l.b16 %v310
      %v352 = vunpack.c.l.b16 %v311
      %v353 = vunpack.c.l.b16 %v312
      %v354 = vunpack.c.l.b16 %v313
      %v355 = vunpack.c.l.b16 %v314
      %v356 = vunpack.c.l.b16 %v315
      %v357 = vunpack.c.l.b16 %v316
      %v358 = vunpack.c.l.b16 %v317
      %v359 = vunpack.c.l.b16 %v318
      %v360 = vunpack.c.l.b16 %v319
      %v361 = vunpack.c.l.b16 %v320
      %v362 = vunpack.c.l.b16 %v321
      %v363 = vunpack.c.l.b16 %v322
      %v364 = vunpack.c.l.b16 %v323
      %v365 = vunpack.c.l.b16 %v324
      %v366 = vunpack.c.l.b16 %v325
      %v367 = vunpack.c.l.b16 %v326
      %v368 = vunpack.c.l.b16 %v327
      %v369 = vpack.c.b16 %v350, %v349
      %v370 = vpack.c.b16 %v352, %v351
      %v371 = vpack.c.b16 %v354, %v353
      %v372 = vpack.c.b16 %v356, %v355
      %v373 = vpack.c.b16 %v358, %v357
      %v374 = vpack.c.b16 %v360, %v359
      %v375 = vpack.c.b16 %v362, %v361
      %v376 = vpack.c.b16 %v364, %v363
      %v377 = vpack.c.b16 %v366, %v365
      %v378 = vpack.c.b16 %v368, %v367
      %vm379 = vcmask 31744
      %v381 = vsel %vm379, %v369, 0
      %v384 = vsel %vm379, %v370, 0
      %v387 = vsel %vm379, %v371, 0
      %v390 = vsel %vm379, %v372, 0
      %v393 = vsel %vm379, %v373, 0
      %v396 = vsel %vm379, %v374, 0
      %v399 = vsel %vm379, %v375, 0
      %v402 = vsel %vm379, %v376, 0
      %v405 = vsel %vm379, %v377, 0
      %v408 = vsel %vm379, %v378, 0
      %vm410 = vcmask 1041408
      %v412 = vsel %vm410, %v328, 0
      %414 = vmatprep.subr.bf16.mxu0 0
      %415 = vmatpush1.bf16.msra.mxu0 %v412
      %416 = vmatprep.subr.bf16.mxu0 0
      %417 = vmatpush1.bf16.msra.mxu0 0
      %418 = vmatprep.subr.bf16.mxu0 0
      %419 = vmatpush1.bf16.msra.mxu0 0
      %420 = vmatprep.subr.bf16.mxu0 0
      %421 = vmatpush1.bf16.msra.mxu0 0
      %422 = vmatprep.subr.bf16.mxu0 0
      %423 = vmatpush1.bf16.msra.mxu0 0
      %424 = vmatprep.subr.bf16.mxu0 0
      %425 = vmatpush1.bf16.msra.mxu0 0
      %426 = vmatprep.subr.bf16.mxu0 0
      %427 = vmatpush1.bf16.msra.mxu0 0
      %428 = vmatprep.subr.bf16.mxu0 0
      %429 = vmatpush1.bf16.msra.mxu0 0
      %430 = vmatprep.subr.bf16.mxu0 0
      %431 = vmatpush1.bf16.msra.mxu0 0
      %432 = vmatprep.subr.bf16.mxu0 0
      %433 = vmatpush1.bf16.msra.mxu0 0
      %434 = vmatprep.subr.bf16.mxu0 0
      %435 = vmatpush1.bf16.msra.mxu0 0
      %436 = vmatprep.subr.bf16.mxu0 0
      %437 = vmatpush1.bf16.msra.mxu0 0
      %438 = vmatprep.subr.bf16.mxu0 0
      %439 = vmatpush1.bf16.msra.mxu0 0
      %440 = vmatprep.subr.bf16.mxu0 0
      %441 = vmatpush1.bf16.msra.mxu0 0
      %442 = vmatprep.subr.bf16.mxu0 0
      %443 = vmatpush1.bf16.msra.mxu0 0
      %444 = vmatprep.subr.bf16.mxu0 0
      %445 = vmatpush1.bf16.msra.mxu0 0
      %446 = vmatprep.mubr.bf16.mxu0 0
      %447 = vmatmul.mubr.bf16.gmra.mrb[0].mxu0 %v381
      %v448 = vpop.f32.mrb[0].mxu0
      %v449 = vadd.f32 0.0, %v448
      %v450 = vpop.f32.mrb[0].mxu0
      %v451 = vpop.f32.mrb[0].mxu0
      %v452 = vadd.f32 0.0, %v451
      %v453 = vpop.f32.mrb[0].mxu0
      %454 = vmatprep.mubr.bf16.mxu0 0
      %455 = vmatmul.mubr.bf16.gmra.mrb[0].mxu0 %v384
      %v456 = vpop.f32.mrb[0].mxu0
      %v457 = vadd.f32 0.0, %v456
      %v458 = vpop.f32.mrb[0].mxu0
      %v459 = vpop.f32.mrb[0].mxu0
      %v460 = vadd.f32 0.0, %v459
      %v461 = vpop.f32.mrb[0].mxu0
      %462 = vmatprep.mubr.bf16.mxu0 0
      %463 = vmatmul.mubr.bf16.gmra.mrb[0].mxu0 %v387
      %v464 = vpop.f32.mrb[0].mxu0
      %v465 = vadd.f32 0.0, %v464
      %v466 = vpop.f32.mrb[0].mxu0
      %v467 = vpop.f32.mrb[0].mxu0
      %v468 = vadd.f32 0.0, %v467
      %v469 = vpop.f32.mrb[0].mxu0
      %470 = vmatprep.mubr.bf16.mxu0 0
      %471 = vmatmul.mubr.bf16.gmra.mrb[0].mxu0 %v390
      %v472 = vpop.f32.mrb[0].mxu0
      %v473 = vadd.f32 0.0, %v472
      %v474 = vpop.f32.mrb[0].mxu0
      %v475 = vpop.f32.mrb[0].mxu0
      %v476 = vadd.f32 0.0, %v475
      %v477 = vpop.f32.mrb[0].mxu0
      %478 = vmatprep.mubr.bf16.mxu0 0
      %479 = vmatmul.mubr.bf16.gmra.mrb[0].mxu0 %v393
      %v480 = vpop.f32.mrb[0].mxu0
      %v481 = vadd.f32 0.0, %v480
      %v482 = vpop.f32.mrb[0].mxu0
      %v483 = vpop.f32.mrb[0].mxu0
      %v484 = vadd.f32 0.0, %v483
      %v485 = vpop.f32.mrb[0].mxu0
      %486 = vmatprep.mubr.bf16.mxu0 0
      %487 = vmatmul.mubr.bf16.gmra.mrb[0].mxu0 %v396
      %v488 = vpop.f32.mrb[0].mxu0
      %v489 = vadd.f32 0.0, %v488
      %v490 = vpop.f32.mrb[0].mxu0
      %v491 = vpop.f32.mrb[0].mxu0
      %v492 = vadd.f32 0.0, %v491
      %v493 = vpop.f32.mrb[0].mxu0
      %494 = vmatprep.mubr.bf16.mxu0 0
      %495 = vmatmul.mubr.bf16.gmra.mrb[0].mxu0 %v399
      %v496 = vpop.f32.mrb[0].mxu0
      %v497 = vadd.f32 0.0, %v496
      %v498 = vpop.f32.mrb[0].mxu0
      %v499 = vpop.f32.mrb[0].mxu0
      %v500 = vadd.f32 0.0, %v499
      %v501 = vpop.f32.mrb[0].mxu0
      %502 = vmatprep.mubr.bf16.mxu0 0
      %503 = vmatmul.mubr.bf16.gmra.mrb[0].mxu0 %v402
      %v504 = vpop.f32.mrb[0].mxu0
      %v505 = vadd.f32 0.0, %v504
      %v506 = vpop.f32.mrb[0].mxu0
      %v507 = vpop.f32.mrb[0].mxu0
      %v508 = vadd.f32 0.0, %v507
      %v509 = vpop.f32.mrb[0].mxu0
      %510 = vmatprep.mubr.bf16.mxu0 0
      %511 = vmatmul.mubr.bf16.gmra.mrb[0].mxu0 %v405
      %v512 = vpop.f32.mrb[0].mxu0
      %v513 = vadd.f32 0.0, %v512
      %v514 = vpop.f32.mrb[0].mxu0
      %v515 = vpop.f32.mrb[0].mxu0
      %v516 = vadd.f32 0.0, %v515
      %v517 = vpop.f32.mrb[0].mxu0
      %518 = vmatprep.mubr.bf16.mxu0 0
      %519 = vmatmul.mubr.bf16.gmra.mrb[0].mxu0 %v408
      %v520 = vpop.f32.mrb[0].mxu0
      %v521 = vadd.f32 0.0, %v520
      %v522 = vpop.f32.mrb[0].mxu0
      %v523 = vpop.f32.mrb[0].mxu0
      %v524 = vadd.f32 0.0, %v523
      %v525 = vpop.f32.mrb[0].mxu0
      %526 = vdwg.mxu0
      %v527 = vld [vmem:[%s2] sm:$0x1]
      %v529 = vlaneseq
      %v530 = vshrl.u32 %v529, 7
      %v531 = vsub.s32 0, %v530
      %v532 = vrot.slane %v527, %v531
      %v534 = vadd.f32 %v449, %v532
      %v535 = vadd.f32 %v452, %v532
      %v536 = vadd.f32 %v457, %v532
      %v537 = vadd.f32 %v460, %v532
      %v538 = vadd.f32 %v465, %v532
      %v539 = vadd.f32 %v468, %v532
      %v540 = vadd.f32 %v473, %v532
      %v541 = vadd.f32 %v476, %v532
      %v542 = vadd.f32 %v481, %v532
      %v543 = vadd.f32 %v484, %v532
      %v544 = vadd.f32 %v489, %v532
      %v545 = vadd.f32 %v492, %v532
      %v546 = vadd.f32 %v497, %v532
      %v547 = vadd.f32 %v500, %v532
      %v548 = vadd.f32 %v505, %v532
      %v549 = vadd.f32 %v508, %v532
      %v550 = vadd.f32 %v513, %v532
      %v551 = vadd.f32 %v516, %v532
      %v552 = vadd.f32 %v521, %v532
      %v553 = vadd.f32 %v524, %v532
      %v554 = vmax.f32 %v534, 0.0
      %v555 = vmax.f32 %v535, 0.0
      %v556 = vmax.f32 %v536, 0.0
      %v557 = vmax.f32 %v537, 0.0
      %v558 = vmax.f32 %v538, 0.0
      %v559 = vmax.f32 %v539, 0.0
      %v560 = vmax.f32 %v540, 0.0
      %v561 = vmax.f32 %v541, 0.0
      %v562 = vmax.f32 %v542, 0.0
      %v563 = vmax.f32 %v543, 0.0
      %v564 = vmax.f32 %v544, 0.0
      %v565 = vmax.f32 %v545, 0.0
      %v566 = vmax.f32 %v546, 0.0
      %v567 = vmax.f32 %v547, 0.0
      %v568 = vmax.f32 %v548, 0.0
      %v569 = vmax.f32 %v549, 0.0
      %v570 = vmax.f32 %v550, 0.0
      %v571 = vmax.f32 %v551, 0.0
      %v572 = vmax.f32 %v552, 0.0
      %v573 = vmax.f32 %v553, 0.0
      %v574 = vmin.f32 %v554, 6.0
      %v575 = vmin.f32 %v555, 6.0
      %v576 = vmin.f32 %v556, 6.0
      %v577 = vmin.f32 %v557, 6.0
      %v578 = vmin.f32 %v558, 6.0
      %v579 = vmin.f32 %v559, 6.0
      %v580 = vmin.f32 %v560, 6.0
      %v581 = vmin.f32 %v561, 6.0
      %v582 = vmin.f32 %v562, 6.0
      %v583 = vmin.f32 %v563, 6.0
      %v584 = vmin.f32 %v564, 6.0
      %v585 = vmin.f32 %v565, 6.0
      %v586 = vmin.f32 %v566, 6.0
      %v587 = vmin.f32 %v567, 6.0
      %v588 = vmin.f32 %v568, 6.0
      %v589 = vmin.f32 %v569, 6.0
      %v590 = vmin.f32 %v570, 6.0
      %v591 = vmin.f32 %v571, 6.0
      %v592 = vmin.f32 %v572, 6.0
      %v593 = vmin.f32 %v573, 6.0
      %v594 = vlaneseq
      %v595 = vshrl.u32 %v594, 7
      %v596 = vadd.s32 %v595, 8
      %v597 = vadd.s32 %v595, 16
      %v598 = vadd.s32 %v595, 24
      %v599 = vadd.s32 %v595, 32
      %v600 = vadd.s32 %v595, 40
      %v601 = vadd.s32 %v595, 48
      %v602 = vadd.s32 %v595, 56
      %v603 = vadd.s32 %v595, 64
      %v604 = vadd.s32 %v595, 72
      %v605 = vadd.s32 %v595, 80
      %v606 = vadd.s32 %v595, 88
      %v607 = vadd.s32 %v595, 96
      %v608 = vadd.s32 %v595, 104
      %v609 = vadd.s32 %v595, 112
      %v610 = vadd.s32 %v595, 120
      %v611 = vadd.s32 %v595, 128
      %v612 = vadd.s32 %v595, 136
      %v613 = vadd.s32 %v595, 144
      %v614 = vadd.s32 %v595, 152
      %p615 = scmp.eq.s32.totalorder %s23, 0
      %vm616 = vcmp.lt.s32.totalorder %v595, 16
      %vm617 = vcmp.lt.s32.totalorder %v596, 16
      %vm618 = vcmp.lt.s32.totalorder %v597, 16
      %vm619 = vcmp.lt.s32.totalorder %v598, 16
      %vm620 = vcmp.lt.s32.totalorder %v599, 16
      %vm621 = vcmp.lt.s32.totalorder %v600, 16
      %vm622 = vcmp.lt.s32.totalorder %v601, 16
      %vm623 = vcmp.lt.s32.totalorder %v602, 16
      %vm624 = vcmp.lt.s32.totalorder %v603, 16
      %vm625 = vcmp.lt.s32.totalorder %v604, 16
      %vm626 = vcmp.lt.s32.totalorder %v605, 16
      %vm627 = vcmp.lt.s32.totalorder %v606, 16
      %vm628 = vcmp.lt.s32.totalorder %v607, 16
      %vm629 = vcmp.lt.s32.totalorder %v608, 16
      %vm630 = vcmp.lt.s32.totalorder %v609, 16
      %vm631 = vcmp.lt.s32.totalorder %v610, 16
      %vm632 = vcmp.lt.s32.totalorder %v611, 16
      %vm633 = vcmp.lt.s32.totalorder %v612, 16
      %vm634 = vcmp.lt.s32.totalorder %v613, 16
      %vm635 = vcmp.lt.s32.totalorder %v614, 16
      %s636 = scalar_select %p615, 1, 0
      %v637 = vstv %s636
      %vm638 = vcmp.eq.s32.totalorder %v637, 1
      %vm639 = vmand %vm638, %vm616
      %vm640 = vmand %vm638, %vm617
      %vm641 = vmand %vm638, %vm618
      %vm642 = vmand %vm638, %vm619
      %vm643 = vmand %vm638, %vm620
      %vm644 = vmand %vm638, %vm621
      %vm645 = vmand %vm638, %vm622
      %vm646 = vmand %vm638, %vm623
      %vm647 = vmand %vm638, %vm624
      %vm648 = vmand %vm638, %vm625
      %vm649 = vmand %vm638, %vm626
      %vm650 = vmand %vm638, %vm627
      %vm651 = vmand %vm638, %vm628
      %vm652 = vmand %vm638, %vm629
      %vm653 = vmand %vm638, %vm630
      %vm654 = vmand %vm638, %vm631
      %vm655 = vmand %vm638, %vm632
      %vm656 = vmand %vm638, %vm633
      %vm657 = vmand %vm638, %vm634
      %vm658 = vmand %vm638, %vm635
      %p659 = scmp.eq.s32.totalorder %s23, 1
      %vm660 = vcmp.ge.s32.totalorder %v595, 144
      %vm661 = vcmp.ge.s32.totalorder %v596, 144
      %vm662 = vcmp.ge.s32.totalorder %v597, 144
      %vm663 = vcmp.ge.s32.totalorder %v598, 144
      %vm664 = vcmp.ge.s32.totalorder %v599, 144
      %vm665 = vcmp.ge.s32.totalorder %v600, 144
      %vm666 = vcmp.ge.s32.totalorder %v601, 144
      %vm667 = vcmp.ge.s32.totalorder %v602, 144
      %vm668 = vcmp.ge.s32.totalorder %v603, 144
      %vm669 = vcmp.ge.s32.totalorder %v604, 144
      %vm670 = vcmp.ge.s32.totalorder %v605, 144
      %vm671 = vcmp.ge.s32.totalorder %v606, 144
      %vm672 = vcmp.ge.s32.totalorder %v607, 144
      %vm673 = vcmp.ge.s32.totalorder %v608, 144
      %vm674 = vcmp.ge.s32.totalorder %v609, 144
      %vm675 = vcmp.ge.s32.totalorder %v610, 144
      %vm676 = vcmp.ge.s32.totalorder %v611, 144
      %vm677 = vcmp.ge.s32.totalorder %v612, 144
      %vm678 = vcmp.ge.s32.totalorder %v613, 144
      %vm679 = vcmp.ge.s32.totalorder %v614, 144
      %s680 = scalar_select %p659, 1, 0
      %v681 = vstv %s680
      %vm682 = vcmp.eq.s32.totalorder %v681, 1
      %vm683 = vmand %vm682, %vm660
      %vm684 = vmand %vm682, %vm661
      %vm685 = vmand %vm682, %vm662
      %vm686 = vmand %vm682, %vm663
      %vm687 = vmand %vm682, %vm664
      %vm688 = vmand %vm682, %vm665
      %vm689 = vmand %vm682, %vm666
      %vm690 = vmand %vm682, %vm667
      %vm691 = vmand %vm682, %vm668
      %vm692 = vmand %vm682, %vm669
      %vm693 = vmand %vm682, %vm670
      %vm694 = vmand %vm682, %vm671
      %vm695 = vmand %vm682, %vm672
      %vm696 = vmand %vm682, %vm673
      %vm697 = vmand %vm682, %vm674
      %vm698 = vmand %vm682, %vm675
      %vm699 = vmand %vm682, %vm676
      %vm700 = vmand %vm682, %vm677
      %vm701 = vmand %vm682, %vm678
      %vm702 = vmand %vm682, %vm679
      %vm703 = vmor %vm639, %vm683
      %vm704 = vmor %vm640, %vm684
      %vm705 = vmor %vm641, %vm685
      %vm706 = vmor %vm642, %vm686
      %vm707 = vmor %vm643, %vm687
      %vm708 = vmor %vm644, %vm688
      %vm709 = vmor %vm645, %vm689
      %vm710 = vmor %vm646, %vm690
      %vm711 = vmor %vm647, %vm691
      %vm712 = vmor %vm648, %vm692
      %vm713 = vmor %vm649, %vm693
      %vm714 = vmor %vm650, %vm694
      %vm715 = vmor %vm651, %vm695
      %vm716 = vmor %vm652, %vm696
      %vm717 = vmor %vm653, %vm697
      %vm718 = vmor %vm654, %vm698
      %vm719 = vmor %vm655, %vm699
      %vm720 = vmor %vm656, %vm700
      %vm721 = vmor %vm657, %vm701
      %vm722 = vmor %vm658, %vm702
      %v723 = vsel %vm703, 1, 0
      %v724 = vsel %vm704, 1, 0
      %v725 = vsel %vm705, 1, 0
      %v726 = vsel %vm706, 1, 0
      %v727 = vsel %vm707, 1, 0
      %v728 = vsel %vm708, 1, 0
      %v729 = vsel %vm709, 1, 0
      %v730 = vsel %vm710, 1, 0
      %v731 = vsel %vm711, 1, 0
      %v732 = vsel %vm712, 1, 0
      %v733 = vsel %vm713, 1, 0
      %v734 = vsel %vm714, 1, 0
      %v735 = vsel %vm715, 1, 0
      %v736 = vsel %vm716, 1, 0
      %v737 = vsel %vm717, 1, 0
      %v738 = vsel %vm718, 1, 0
      %v739 = vsel %vm719, 1, 0
      %v740 = vsel %vm720, 1, 0
      %v741 = vsel %vm721, 1, 0
      %v742 = vsel %vm722, 1, 0
      %vm743 = vcmp.eq.s32.totalorder %v723, 1
      %vm744 = vcmp.eq.s32.totalorder %v724, 1
      %vm745 = vcmp.eq.s32.totalorder %v725, 1
      %vm746 = vcmp.eq.s32.totalorder %v726, 1
      %vm747 = vcmp.eq.s32.totalorder %v727, 1
      %vm748 = vcmp.eq.s32.totalorder %v728, 1
      %vm749 = vcmp.eq.s32.totalorder %v729, 1
      %vm750 = vcmp.eq.s32.totalorder %v730, 1
      %vm751 = vcmp.eq.s32.totalorder %v731, 1
      %vm752 = vcmp.eq.s32.totalorder %v732, 1
      %vm753 = vcmp.eq.s32.totalorder %v733, 1
      %vm754 = vcmp.eq.s32.totalorder %v734, 1
      %vm755 = vcmp.eq.s32.totalorder %v735, 1
      %vm756 = vcmp.eq.s32.totalorder %v736, 1
      %vm757 = vcmp.eq.s32.totalorder %v737, 1
      %vm758 = vcmp.eq.s32.totalorder %v738, 1
      %vm759 = vcmp.eq.s32.totalorder %v739, 1
      %vm760 = vcmp.eq.s32.totalorder %v740, 1
      %vm761 = vcmp.eq.s32.totalorder %v741, 1
      %vm762 = vcmp.eq.s32.totalorder %v742, 1
      %v763 = vsel %vm743, 0.0, %v574
      %v764 = vsel %vm744, 0.0, %v575
      %v765 = vsel %vm745, 0.0, %v576
      %v766 = vsel %vm746, 0.0, %v577
      %v767 = vsel %vm747, 0.0, %v578
      %v768 = vsel %vm748, 0.0, %v579
      %v769 = vsel %vm749, 0.0, %v580
      %v770 = vsel %vm750, 0.0, %v581
      %v771 = vsel %vm751, 0.0, %v582
      %v772 = vsel %vm752, 0.0, %v583
      %v773 = vsel %vm753, 0.0, %v584
      %v774 = vsel %vm754, 0.0, %v585
      %v775 = vsel %vm755, 0.0, %v586
      %v776 = vsel %vm756, 0.0, %v587
      %v777 = vsel %vm757, 0.0, %v588
      %v778 = vsel %vm758, 0.0, %v589
      %v779 = vsel %vm759, 0.0, %v590
      %v780 = vsel %vm760, 0.0, %v591
      %v781 = vsel %vm761, 0.0, %v592
      %v782 = vsel %vm762, 0.0, %v593
      %vm783 = vcmp.lt.s32.totalorder %v595, 0
      %v784 = vsub.s32 0, %v595
      %v785 = vsel %vm783, %v784, %v595
      %v786 = vshrl.u32 %v785, 4
      %v787 = vand.u32 %v785, 15
      %v788 = vsub.s32 0, %v787
      %v789 = vsel %vm783, %v788, %v787
      %vm790 = vcmp.lt.s32.totalorder %v596, 0
      %v791 = vsub.s32 0, %v596
      %v792 = vsel %vm790, %v791, %v596
      %v793 = vshrl.u32 %v792, 4
      %v794 = vand.u32 %v792, 15
      %v795 = vsub.s32 0, %v794
      %v796 = vsel %vm790, %v795, %v794
      %vm797 = vcmp.lt.s32.totalorder %v597, 0
      %v798 = vsub.s32 0, %v597
      %v799 = vsel %vm797, %v798, %v597
      %v800 = vshrl.u32 %v799, 4
      %v801 = vand.u32 %v799, 15
      %v802 = vsub.s32 0, %v801
      %v803 = vsel %vm797, %v802, %v801
      %vm804 = vcmp.lt.s32.totalorder %v598, 0
      %v805 = vsub.s32 0, %v598
      %v806 = vsel %vm804, %v805, %v598
      %v807 = vshrl.u32 %v806, 4
      %v808 = vand.u32 %v806, 15
      %v809 = vsub.s32 0, %v808
      %v810 = vsel %vm804, %v809, %v808
      %vm811 = vcmp.lt.s32.totalorder %v599, 0
      %v812 = vsub.s32 0, %v599
      %v813 = vsel %vm811, %v812, %v599
      %v814 = vshrl.u32 %v813, 4
      %v815 = vand.u32 %v813, 15
      %v816 = vsub.s32 0, %v815
      %v817 = vsel %vm811, %v816, %v815
      %vm818 = vcmp.lt.s32.totalorder %v600, 0
      %v819 = vsub.s32 0, %v600
      %v820 = vsel %vm818, %v819, %v600
      %v821 = vshrl.u32 %v820, 4
      %v822 = vand.u32 %v820, 15
      %v823 = vsub.s32 0, %v822
      %v824 = vsel %vm818, %v823, %v822
      %vm825 = vcmp.lt.s32.totalorder %v601, 0
      %v826 = vsub.s32 0, %v601
      %v827 = vsel %vm825, %v826, %v601
      %v828 = vshrl.u32 %v827, 4
      %v829 = vand.u32 %v827, 15
      %v830 = vsub.s32 0, %v829
      %v831 = vsel %vm825, %v830, %v829
      %vm832 = vcmp.lt.s32.totalorder %v602, 0
      %v833 = vsub.s32 0, %v602
      %v834 = vsel %vm832, %v833, %v602
      %v835 = vshrl.u32 %v834, 4
      %v836 = vand.u32 %v834, 15
      %v837 = vsub.s32 0, %v836
      %v838 = vsel %vm832, %v837, %v836
      %vm839 = vcmp.lt.s32.totalorder %v603, 0
      %v840 = vsub.s32 0, %v603
      %v841 = vsel %vm839, %v840, %v603
      %v842 = vshrl.u32 %v841, 4
      %v843 = vand.u32 %v841, 15
      %v844 = vsub.s32 0, %v843
      %v845 = vsel %vm839, %v844, %v843
      %vm846 = vcmp.lt.s32.totalorder %v604, 0
      %v847 = vsub.s32 0, %v604
      %v848 = vsel %vm846, %v847, %v604
      %v849 = vshrl.u32 %v848, 4
      %v850 = vand.u32 %v848, 15
      %v851 = vsub.s32 0, %v850
      %v852 = vsel %vm846, %v851, %v850
      %vm853 = vcmp.lt.s32.totalorder %v605, 0
      %v854 = vsub.s32 0, %v605
      %v855 = vsel %vm853, %v854, %v605
      %v856 = vshrl.u32 %v855, 4
      %v857 = vand.u32 %v855, 15
      %v858 = vsub.s32 0, %v857
      %v859 = vsel %vm853, %v858, %v857
      %vm860 = vcmp.lt.s32.totalorder %v606, 0
      %v861 = vsub.s32 0, %v606
      %v862 = vsel %vm860, %v861, %v606
      %v863 = vshrl.u32 %v862, 4
      %v864 = vand.u32 %v862, 15
      %v865 = vsub.s32 0, %v864
      %v866 = vsel %vm860, %v865, %v864
      %vm867 = vcmp.lt.s32.totalorder %v607, 0
      %v868 = vsub.s32 0, %v607
      %v869 = vsel %vm867, %v868, %v607
      %v870 = vshrl.u32 %v869, 4
      %v871 = vand.u32 %v869, 15
      %v872 = vsub.s32 0, %v871
      %v873 = vsel %vm867, %v872, %v871
      %vm874 = vcmp.lt.s32.totalorder %v608, 0
      %v875 = vsub.s32 0, %v608
      %v876 = vsel %vm874, %v875, %v608
      %v877 = vshrl.u32 %v876, 4
      %v878 = vand.u32 %v876, 15
      %v879 = vsub.s32 0, %v878
      %v880 = vsel %vm874, %v879, %v878
      %vm881 = vcmp.lt.s32.totalorder %v609, 0
      %v882 = vsub.s32 0, %v609
      %v883 = vsel %vm881, %v882, %v609
      %v884 = vshrl.u32 %v883, 4
      %v885 = vand.u32 %v883, 15
      %v886 = vsub.s32 0, %v885
      %v887 = vsel %vm881, %v886, %v885
      %vm888 = vcmp.lt.s32.totalorder %v610, 0
      %v889 = vsub.s32 0, %v610
      %v890 = vsel %vm888, %v889, %v610
      %v891 = vshrl.u32 %v890, 4
      %v892 = vand.u32 %v890, 15
      %v893 = vsub.s32 0, %v892
      %v894 = vsel %vm888, %v893, %v892
      %vm895 = vcmp.lt.s32.totalorder %v611, 0
      %v896 = vsub.s32 0, %v611
      %v897 = vsel %vm895, %v896, %v611
      %v898 = vshrl.u32 %v897, 4
      %v899 = vand.u32 %v897, 15
      %v900 = vsub.s32 0, %v899
      %v901 = vsel %vm895, %v900, %v899
      %vm902 = vcmp.lt.s32.totalorder %v612, 0
      %v903 = vsub.s32 0, %v612
      %v904 = vsel %vm902, %v903, %v612
      %v905 = vshrl.u32 %v904, 4
      %v906 = vand.u32 %v904, 15
      %v907 = vsub.s32 0, %v906
      %v908 = vsel %vm902, %v907, %v906
      %vm909 = vcmp.lt.s32.totalorder %v613, 0
      %v910 = vsub.s32 0, %v613
      %v911 = vsel %vm909, %v910, %v613
      %v912 = vshrl.u32 %v911, 4
      %v913 = vand.u32 %v911, 15
      %v914 = vsub.s32 0, %v913
      %v915 = vsel %vm909, %v914, %v913
      %vm916 = vcmp.lt.s32.totalorder %v614, 0
      %v917 = vsub.s32 0, %v614
      %v918 = vsel %vm916, %v917, %v614
      %v919 = vshrl.u32 %v918, 4
      %v920 = vand.u32 %v918, 15
      %v921 = vsub.s32 0, %v920
      %v922 = vsel %vm916, %v921, %v920
      %vm923 = vcmp.ne.s32.totalorder %v789, 0
      %vm924 = vcmp.ne.s32.totalorder %v796, 0
      %vm925 = vcmp.ne.s32.totalorder %v803, 0
      %vm926 = vcmp.ne.s32.totalorder %v810, 0
      %vm927 = vcmp.ne.s32.totalorder %v817, 0
      %vm928 = vcmp.ne.s32.totalorder %v824, 0
      %vm929 = vcmp.ne.s32.totalorder %v831, 0
      %vm930 = vcmp.ne.s32.totalorder %v838, 0
      %vm931 = vcmp.ne.s32.totalorder %v845, 0
      %vm932 = vcmp.ne.s32.totalorder %v852, 0
      %vm933 = vcmp.ne.s32.totalorder %v859, 0
      %vm934 = vcmp.ne.s32.totalorder %v866, 0
      %vm935 = vcmp.ne.s32.totalorder %v873, 0
      %vm936 = vcmp.ne.s32.totalorder %v880, 0
      %vm937 = vcmp.ne.s32.totalorder %v887, 0
      %vm938 = vcmp.ne.s32.totalorder %v894, 0
      %vm939 = vcmp.ne.s32.totalorder %v901, 0
      %vm940 = vcmp.ne.s32.totalorder %v908, 0
      %vm941 = vcmp.ne.s32.totalorder %v915, 0
      %vm942 = vcmp.ne.s32.totalorder %v922, 0
      %vm943 = vcmp.lt.s32.totalorder %v789, 0
      %vm944 = vcmp.lt.s32.totalorder %v796, 0
      %vm945 = vcmp.lt.s32.totalorder %v803, 0
      %vm946 = vcmp.lt.s32.totalorder %v810, 0
      %vm947 = vcmp.lt.s32.totalorder %v817, 0
      %vm948 = vcmp.lt.s32.totalorder %v824, 0
      %vm949 = vcmp.lt.s32.totalorder %v831, 0
      %vm950 = vcmp.lt.s32.totalorder %v838, 0
      %vm951 = vcmp.lt.s32.totalorder %v845, 0
      %vm952 = vcmp.lt.s32.totalorder %v852, 0
      %vm953 = vcmp.lt.s32.totalorder %v859, 0
      %vm954 = vcmp.lt.s32.totalorder %v866, 0
      %vm955 = vcmp.lt.s32.totalorder %v873, 0
      %vm956 = vcmp.lt.s32.totalorder %v880, 0
      %vm957 = vcmp.lt.s32.totalorder %v887, 0
      %vm958 = vcmp.lt.s32.totalorder %v894, 0
      %vm959 = vcmp.lt.s32.totalorder %v901, 0
      %vm960 = vcmp.lt.s32.totalorder %v908, 0
      %vm961 = vcmp.lt.s32.totalorder %v915, 0
      %vm962 = vcmp.lt.s32.totalorder %v922, 0
      %vm963 = vmand %vm943, %vm923
      %vm964 = vmand %vm944, %vm924
      %vm965 = vmand %vm945, %vm925
      %vm966 = vmand %vm946, %vm926
      %vm967 = vmand %vm947, %vm927
      %vm968 = vmand %vm948, %vm928
      %vm969 = vmand %vm949, %vm929
      %vm970 = vmand %vm950, %vm930
      %vm971 = vmand %vm951, %vm931
      %vm972 = vmand %vm952, %vm932
      %vm973 = vmand %vm953, %vm933
      %vm974 = vmand %vm954, %vm934
      %vm975 = vmand %vm955, %vm935
      %vm976 = vmand %vm956, %vm936
      %vm977 = vmand %vm957, %vm937
      %vm978 = vmand %vm958, %vm938
      %vm979 = vmand %vm959, %vm939
      %vm980 = vmand %vm960, %vm940
      %vm981 = vmand %vm961, %vm941
      %vm982 = vmand %vm962, %vm942
      %v983 = vadd.s32 %v789, 16
      %v984 = vadd.s32 %v796, 16
      %v985 = vadd.s32 %v803, 16
      %v986 = vadd.s32 %v810, 16
      %v987 = vadd.s32 %v817, 16
      %v988 = vadd.s32 %v824, 16
      %v989 = vadd.s32 %v831, 16
      %v990 = vadd.s32 %v838, 16
      %v991 = vadd.s32 %v845, 16
      %v992 = vadd.s32 %v852, 16
      %v993 = vadd.s32 %v859, 16
      %v994 = vadd.s32 %v866, 16
      %v995 = vadd.s32 %v873, 16
      %v996 = vadd.s32 %v880, 16
      %v997 = vadd.s32 %v887, 16
      %v998 = vadd.s32 %v894, 16
      %v999 = vadd.s32 %v901, 16
      %v1000 = vadd.s32 %v908, 16
      %v1001 = vadd.s32 %v915, 16
      %v1002 = vadd.s32 %v922, 16
      %v1003 = vsel %vm963, %v983, %v789
      %v1004 = vsel %vm964, %v984, %v796
      %v1005 = vsel %vm965, %v985, %v803
      %v1006 = vsel %vm966, %v986, %v810
      %v1007 = vsel %vm967, %v987, %v817
      %v1008 = vsel %vm968, %v988, %v824
      %v1009 = vsel %vm969, %v989, %v831
      %v1010 = vsel %vm970, %v990, %v838
      %v1011 = vsel %vm971, %v991, %v845
      %v1012 = vsel %vm972, %v992, %v852
      %v1013 = vsel %vm973, %v993, %v859
      %v1014 = vsel %vm974, %v994, %v866
      %v1015 = vsel %vm975, %v995, %v873
      %v1016 = vsel %vm976, %v996, %v880
      %v1017 = vsel %vm977, %v997, %v887
      %v1018 = vsel %vm978, %v998, %v894
      %v1019 = vsel %vm979, %v999, %v901
      %v1020 = vsel %vm980, %v1000, %v908
      %v1021 = vsel %vm981, %v1001, %v915
      %v1022 = vsel %vm982, %v1002, %v922
      %vm1043 = vcmask 1046528
      %v1044 = vrot.slane %v763, 1
      %v1045 = vrot.slane %v764, 1
      %v1046 = vsel %vm1043, %v1044, %v1045
      %v1047 = vrot.slane %v765, 1
      %v1048 = vsel %vm1043, %v1045, %v1047
      %v1049 = vrot.slane %v766, 1
      %v1050 = vsel %vm1043, %v1047, %v1049
      %v1051 = vrot.slane %v767, 1
      %v1052 = vsel %vm1043, %v1049, %v1051
      %v1053 = vrot.slane %v768, 1
      %v1054 = vsel %vm1043, %v1051, %v1053
      %v1055 = vrot.slane %v769, 1
      %v1056 = vsel %vm1043, %v1053, %v1055
      %v1057 = vrot.slane %v770, 1
      %v1058 = vsel %vm1043, %v1055, %v1057
      %v1059 = vrot.slane %v771, 1
      %v1060 = vsel %vm1043, %v1057, %v1059
      %v1061 = vrot.slane %v772, 1
      %v1062 = vsel %vm1043, %v1059, %v1061
      %v1063 = vrot.slane %v773, 1
      %v1064 = vsel %vm1043, %v1061, %v1063
      %v1065 = vrot.slane %v774, 1
      %v1066 = vsel %vm1043, %v1063, %v1065
      %v1067 = vrot.slane %v775, 1
      %v1068 = vsel %vm1043, %v1065, %v1067
      %v1069 = vrot.slane %v776, 1
      %v1070 = vsel %vm1043, %v1067, %v1069
      %v1071 = vrot.slane %v777, 1
      %v1072 = vsel %vm1043, %v1069, %v1071
      %v1073 = vrot.slane %v778, 1
      %v1074 = vsel %vm1043, %v1071, %v1073
      %v1075 = vrot.slane %v779, 1
      %v1076 = vsel %vm1043, %v1073, %v1075
      %v1077 = vrot.slane %v780, 1
      %v1078 = vsel %vm1043, %v1075, %v1077
      %v1079 = vrot.slane %v781, 1
      %v1080 = vsel %vm1043, %v1077, %v1079
      %v1081 = vrot.slane %v782, 1
      %v1082 = vsel %vm1043, %v1079, %v1081
      %v1103 = vsel %vm1043, %v1081, 0.0
      %vm1104 = vcmask 1040384
      %v1105 = vrot.slane %v763, 7
      %v1106 = vrot.slane %v764, 7
      %v1107 = vsel %vm1104, %v1105, %v1106
      %v1108 = vrot.slane %v765, 7
      %v1109 = vsel %vm1104, %v1106, %v1108
      %v1110 = vrot.slane %v766, 7
      %v1111 = vsel %vm1104, %v1108, %v1110
      %v1112 = vrot.slane %v767, 7
      %v1113 = vsel %vm1104, %v1110, %v1112
      %v1114 = vrot.slane %v768, 7
      %v1115 = vsel %vm1104, %v1112, %v1114
      %v1116 = vrot.slane %v769, 7
      %v1117 = vsel %vm1104, %v1114, %v1116
      %v1118 = vrot.slane %v770, 7
      %v1119 = vsel %vm1104, %v1116, %v1118
      %v1120 = vrot.slane %v771, 7
      %v1121 = vsel %vm1104, %v1118, %v1120
      %v1122 = vrot.slane %v772, 7
      %v1123 = vsel %vm1104, %v1120, %v1122
      %v1124 = vrot.slane %v773, 7
      %v1125 = vsel %vm1104, %v1122, %v1124
      %v1126 = vrot.slane %v774, 7
      %v1127 = vsel %vm1104, %v1124, %v1126
      %v1128 = vrot.slane %v775, 7
      %v1129 = vsel %vm1104, %v1126, %v1128
      %v1130 = vrot.slane %v776, 7
      %v1131 = vsel %vm1104, %v1128, %v1130
      %v1132 = vrot.slane %v777, 7
      %v1133 = vsel %vm1104, %v1130, %v1132
      %v1134 = vrot.slane %v778, 7
      %v1135 = vsel %vm1104, %v1132, %v1134
      %v1136 = vrot.slane %v779, 7
      %v1137 = vsel %vm1104, %v1134, %v1136
      %v1138 = vrot.slane %v780, 7
      %v1139 = vsel %vm1104, %v1136, %v1138
      %v1140 = vrot.slane %v781, 7
      %v1141 = vsel %vm1104, %v1138, %v1140
      %v1142 = vrot.slane %v782, 7
      %v1143 = vsel %vm1104, %v1140, %v1142
      %v1164 = vsel %vm1104, 0.0, %v1105
      %vm1165 = vcmp.lt.s32.totalorder %v1003, 15
      %vm1166 = vcmp.lt.s32.totalorder %v1004, 15
      %vm1167 = vcmp.lt.s32.totalorder %v1005, 15
      %vm1168 = vcmp.lt.s32.totalorder %v1006, 15
      %vm1169 = vcmp.lt.s32.totalorder %v1007, 15
      %vm1170 = vcmp.lt.s32.totalorder %v1008, 15
      %vm1171 = vcmp.lt.s32.totalorder %v1009, 15
      %vm1172 = vcmp.lt.s32.totalorder %v1010, 15
      %vm1173 = vcmp.lt.s32.totalorder %v1011, 15
      %vm1174 = vcmp.lt.s32.totalorder %v1012, 15
      %vm1175 = vcmp.lt.s32.totalorder %v1013, 15
      %vm1176 = vcmp.lt.s32.totalorder %v1014, 15
      %vm1177 = vcmp.lt.s32.totalorder %v1015, 15
      %vm1178 = vcmp.lt.s32.totalorder %v1016, 15
      %vm1179 = vcmp.lt.s32.totalorder %v1017, 15
      %vm1180 = vcmp.lt.s32.totalorder %v1018, 15
      %vm1181 = vcmp.lt.s32.totalorder %v1019, 15
      %vm1182 = vcmp.lt.s32.totalorder %v1020, 15
      %vm1183 = vcmp.lt.s32.totalorder %v1021, 15
      %vm1184 = vcmp.lt.s32.totalorder %v1022, 15
      %v1185 = vsel %vm1165, 1, 0
      %v1186 = vsel %vm1166, 1, 0
      %v1187 = vsel %vm1167, 1, 0
      %v1188 = vsel %vm1168, 1, 0
      %v1189 = vsel %vm1169, 1, 0
      %v1190 = vsel %vm1170, 1, 0
      %v1191 = vsel %vm1171, 1, 0
      %v1192 = vsel %vm1172, 1, 0
      %v1193 = vsel %vm1173, 1, 0
      %v1194 = vsel %vm1174, 1, 0
      %v1195 = vsel %vm1175, 1, 0
      %v1196 = vsel %vm1176, 1, 0
      %v1197 = vsel %vm1177, 1, 0
      %v1198 = vsel %vm1178, 1, 0
      %v1199 = vsel %vm1179, 1, 0
      %v1200 = vsel %vm1180, 1, 0
      %v1201 = vsel %vm1181, 1, 0
      %v1202 = vsel %vm1182, 1, 0
      %v1203 = vsel %vm1183, 1, 0
      %v1204 = vsel %vm1184, 1, 0
      %vm1205 = vcmp.eq.s32.totalorder %v1185, 1
      %vm1206 = vcmp.eq.s32.totalorder %v1186, 1
      %vm1207 = vcmp.eq.s32.totalorder %v1187, 1
      %vm1208 = vcmp.eq.s32.totalorder %v1188, 1
      %vm1209 = vcmp.eq.s32.totalorder %v1189, 1
      %vm1210 = vcmp.eq.s32.totalorder %v1190, 1
      %vm1211 = vcmp.eq.s32.totalorder %v1191, 1
      %vm1212 = vcmp.eq.s32.totalorder %v1192, 1
      %vm1213 = vcmp.eq.s32.totalorder %v1193, 1
      %vm1214 = vcmp.eq.s32.totalorder %v1194, 1
      %vm1215 = vcmp.eq.s32.totalorder %v1195, 1
      %vm1216 = vcmp.eq.s32.totalorder %v1196, 1
      %vm1217 = vcmp.eq.s32.totalorder %v1197, 1
      %vm1218 = vcmp.eq.s32.totalorder %v1198, 1
      %vm1219 = vcmp.eq.s32.totalorder %v1199, 1
      %vm1220 = vcmp.eq.s32.totalorder %v1200, 1
      %vm1221 = vcmp.eq.s32.totalorder %v1201, 1
      %vm1222 = vcmp.eq.s32.totalorder %v1202, 1
      %vm1223 = vcmp.eq.s32.totalorder %v1203, 1
      %vm1224 = vcmp.eq.s32.totalorder %v1204, 1
      %v1225 = vsel %vm1205, %v1046, 0.0
      %v1226 = vsel %vm1206, %v1048, 0.0
      %v1227 = vsel %vm1207, %v1050, 0.0
      %v1228 = vsel %vm1208, %v1052, 0.0
      %v1229 = vsel %vm1209, %v1054, 0.0
      %v1230 = vsel %vm1210, %v1056, 0.0
      %v1231 = vsel %vm1211, %v1058, 0.0
      %v1232 = vsel %vm1212, %v1060, 0.0
      %v1233 = vsel %vm1213, %v1062, 0.0
      %v1234 = vsel %vm1214, %v1064, 0.0
      %v1235 = vsel %vm1215, %v1066, 0.0
      %v1236 = vsel %vm1216, %v1068, 0.0
      %v1237 = vsel %vm1217, %v1070, 0.0
      %v1238 = vsel %vm1218, %v1072, 0.0
      %v1239 = vsel %vm1219, %v1074, 0.0
      %v1240 = vsel %vm1220, %v1076, 0.0
      %v1241 = vsel %vm1221, %v1078, 0.0
      %v1242 = vsel %vm1222, %v1080, 0.0
      %v1243 = vsel %vm1223, %v1082, 0.0
      %v1244 = vsel %vm1224, %v1103, 0.0
      %vm1245 = vcmp.gt.s32.totalorder %v1003, 0
      %vm1246 = vcmp.gt.s32.totalorder %v1004, 0
      %vm1247 = vcmp.gt.s32.totalorder %v1005, 0
      %vm1248 = vcmp.gt.s32.totalorder %v1006, 0
      %vm1249 = vcmp.gt.s32.totalorder %v1007, 0
      %vm1250 = vcmp.gt.s32.totalorder %v1008, 0
      %vm1251 = vcmp.gt.s32.totalorder %v1009, 0
      %vm1252 = vcmp.gt.s32.totalorder %v1010, 0
      %vm1253 = vcmp.gt.s32.totalorder %v1011, 0
      %vm1254 = vcmp.gt.s32.totalorder %v1012, 0
      %vm1255 = vcmp.gt.s32.totalorder %v1013, 0
      %vm1256 = vcmp.gt.s32.totalorder %v1014, 0
      %vm1257 = vcmp.gt.s32.totalorder %v1015, 0
      %vm1258 = vcmp.gt.s32.totalorder %v1016, 0
      %vm1259 = vcmp.gt.s32.totalorder %v1017, 0
      %vm1260 = vcmp.gt.s32.totalorder %v1018, 0
      %vm1261 = vcmp.gt.s32.totalorder %v1019, 0
      %vm1262 = vcmp.gt.s32.totalorder %v1020, 0
      %vm1263 = vcmp.gt.s32.totalorder %v1021, 0
      %vm1264 = vcmp.gt.s32.totalorder %v1022, 0
      %v1265 = vsel %vm1245, 1, 0
      %v1266 = vsel %vm1246, 1, 0
      %v1267 = vsel %vm1247, 1, 0
      %v1268 = vsel %vm1248, 1, 0
      %v1269 = vsel %vm1249, 1, 0
      %v1270 = vsel %vm1250, 1, 0
      %v1271 = vsel %vm1251, 1, 0
      %v1272 = vsel %vm1252, 1, 0
      %v1273 = vsel %vm1253, 1, 0
      %v1274 = vsel %vm1254, 1, 0
      %v1275 = vsel %vm1255, 1, 0
      %v1276 = vsel %vm1256, 1, 0
      %v1277 = vsel %vm1257, 1, 0
      %v1278 = vsel %vm1258, 1, 0
      %v1279 = vsel %vm1259, 1, 0
      %v1280 = vsel %vm1260, 1, 0
      %v1281 = vsel %vm1261, 1, 0
      %v1282 = vsel %vm1262, 1, 0
      %v1283 = vsel %vm1263, 1, 0
      %v1284 = vsel %vm1264, 1, 0
      %vm1285 = vcmp.eq.s32.totalorder %v1265, 1
      %vm1286 = vcmp.eq.s32.totalorder %v1266, 1
      %vm1287 = vcmp.eq.s32.totalorder %v1267, 1
      %vm1288 = vcmp.eq.s32.totalorder %v1268, 1
      %vm1289 = vcmp.eq.s32.totalorder %v1269, 1
      %vm1290 = vcmp.eq.s32.totalorder %v1270, 1
      %vm1291 = vcmp.eq.s32.totalorder %v1271, 1
      %vm1292 = vcmp.eq.s32.totalorder %v1272, 1
      %vm1293 = vcmp.eq.s32.totalorder %v1273, 1
      %vm1294 = vcmp.eq.s32.totalorder %v1274, 1
      %vm1295 = vcmp.eq.s32.totalorder %v1275, 1
      %vm1296 = vcmp.eq.s32.totalorder %v1276, 1
      %vm1297 = vcmp.eq.s32.totalorder %v1277, 1
      %vm1298 = vcmp.eq.s32.totalorder %v1278, 1
      %vm1299 = vcmp.eq.s32.totalorder %v1279, 1
      %vm1300 = vcmp.eq.s32.totalorder %v1280, 1
      %vm1301 = vcmp.eq.s32.totalorder %v1281, 1
      %vm1302 = vcmp.eq.s32.totalorder %v1282, 1
      %vm1303 = vcmp.eq.s32.totalorder %v1283, 1
      %vm1304 = vcmp.eq.s32.totalorder %v1284, 1
      %v1305 = vsel %vm1285, %v1164, 0.0
      %v1306 = vsel %vm1286, %v1107, 0.0
      %v1307 = vsel %vm1287, %v1109, 0.0
      %v1308 = vsel %vm1288, %v1111, 0.0
      %v1309 = vsel %vm1289, %v1113, 0.0
      %v1310 = vsel %vm1290, %v1115, 0.0
      %v1311 = vsel %vm1291, %v1117, 0.0
      %v1312 = vsel %vm1292, %v1119, 0.0
      %v1313 = vsel %vm1293, %v1121, 0.0
      %v1314 = vsel %vm1294, %v1123, 0.0
      %v1315 = vsel %vm1295, %v1125, 0.0
      %v1316 = vsel %vm1296, %v1127, 0.0
      %v1317 = vsel %vm1297, %v1129, 0.0
      %v1318 = vsel %vm1298, %v1131, 0.0
      %v1319 = vsel %vm1299, %v1133, 0.0
      %v1320 = vsel %vm1300, %v1135, 0.0
      %v1321 = vsel %vm1301, %v1137, 0.0
      %v1322 = vsel %vm1302, %v1139, 0.0
      %v1323 = vsel %vm1303, %v1141, 0.0
      %v1324 = vsel %vm1304, %v1143, 0.0
      %v1325 = vld [vmem:[%s3] sm:$0x1]
      %v1327 = vlaneseq
      %v1328 = vshrl.u32 %v1327, 7
      %v1329 = vsub.s32 0, %v1328
      %v1330 = vrot.slane %v1325, %v1329
      %v1332 = vmul.f32 %v1305, %v1330
      %v1333 = vmul.f32 %v1306, %v1330
      %v1334 = vmul.f32 %v1307, %v1330
      %v1335 = vmul.f32 %v1308, %v1330
      %v1336 = vmul.f32 %v1309, %v1330
      %v1337 = vmul.f32 %v1310, %v1330
      %v1338 = vmul.f32 %v1311, %v1330
      %v1339 = vmul.f32 %v1312, %v1330
      %v1340 = vmul.f32 %v1313, %v1330
      %v1341 = vmul.f32 %v1314, %v1330
      %v1342 = vmul.f32 %v1315, %v1330
      %v1343 = vmul.f32 %v1316, %v1330
      %v1344 = vmul.f32 %v1317, %v1330
      %v1345 = vmul.f32 %v1318, %v1330
      %v1346 = vmul.f32 %v1319, %v1330
      %v1347 = vmul.f32 %v1320, %v1330
      %s1348 = scalar_lea.vmem %s3, 1
      %v1349 = vld [vmem:[%s1348] sm:$0x1]
      %v1351 = vlaneseq
      %v1352 = vshrl.u32 %v1351, 7
      %v1353 = vsub.s32 0, %v1352
      %v1354 = vrot.slane %v1349, %v1353
      %v1356 = vmul.f32 %v763, %v1354
      %v1357 = vmul.f32 %v764, %v1354
      %v1358 = vmul.f32 %v765, %v1354
      %v1359 = vmul.f32 %v766, %v1354
      %v1360 = vmul.f32 %v767, %v1354
      %v1361 = vmul.f32 %v768, %v1354
      %v1362 = vmul.f32 %v769, %v1354
      %v1363 = vmul.f32 %v770, %v1354
      %v1364 = vmul.f32 %v771, %v1354
      %v1365 = vmul.f32 %v772, %v1354
      %v1366 = vmul.f32 %v773, %v1354
      %v1367 = vmul.f32 %v774, %v1354
      %v1368 = vmul.f32 %v775, %v1354
      %v1369 = vmul.f32 %v776, %v1354
      %v1370 = vmul.f32 %v777, %v1354
      %v1371 = vmul.f32 %v778, %v1354
      %v1372 = vadd.f32 %v1332, %v1356
      %v1373 = vadd.f32 %v1333, %v1357
      %v1374 = vadd.f32 %v1334, %v1358
      %v1375 = vadd.f32 %v1335, %v1359
      %v1376 = vadd.f32 %v1336, %v1360
      %v1377 = vadd.f32 %v1337, %v1361
      %v1378 = vadd.f32 %v1338, %v1362
      %v1379 = vadd.f32 %v1339, %v1363
      %v1380 = vadd.f32 %v1340, %v1364
      %v1381 = vadd.f32 %v1341, %v1365
      %v1382 = vadd.f32 %v1342, %v1366
      %v1383 = vadd.f32 %v1343, %v1367
      %v1384 = vadd.f32 %v1344, %v1368
      %v1385 = vadd.f32 %v1345, %v1369
      %v1386 = vadd.f32 %v1346, %v1370
      %v1387 = vadd.f32 %v1347, %v1371
      %s1388 = scalar_lea.vmem %s3, 2
      %v1389 = vld [vmem:[%s1388] sm:$0x1]
      %v1391 = vlaneseq
      %v1392 = vshrl.u32 %v1391, 7
      %v1393 = vsub.s32 0, %v1392
      %v1394 = vrot.slane %v1389, %v1393
      %v1396 = vmul.f32 %v1225, %v1394
      %v1397 = vmul.f32 %v1226, %v1394
      %v1398 = vmul.f32 %v1227, %v1394
      %v1399 = vmul.f32 %v1228, %v1394
      %v1400 = vmul.f32 %v1229, %v1394
      %v1401 = vmul.f32 %v1230, %v1394
      %v1402 = vmul.f32 %v1231, %v1394
      %v1403 = vmul.f32 %v1232, %v1394
      %v1404 = vmul.f32 %v1233, %v1394
      %v1405 = vmul.f32 %v1234, %v1394
      %v1406 = vmul.f32 %v1235, %v1394
      %v1407 = vmul.f32 %v1236, %v1394
      %v1408 = vmul.f32 %v1237, %v1394
      %v1409 = vmul.f32 %v1238, %v1394
      %v1410 = vmul.f32 %v1239, %v1394
      %v1411 = vmul.f32 %v1240, %v1394
      %v1412 = vadd.f32 %v1372, %v1396
      %v1413 = vadd.f32 %v1373, %v1397
      %v1414 = vadd.f32 %v1374, %v1398
      %v1415 = vadd.f32 %v1375, %v1399
      %v1416 = vadd.f32 %v1376, %v1400
      %v1417 = vadd.f32 %v1377, %v1401
      %v1418 = vadd.f32 %v1378, %v1402
      %v1419 = vadd.f32 %v1379, %v1403
      %v1420 = vadd.f32 %v1380, %v1404
      %v1421 = vadd.f32 %v1381, %v1405
      %v1422 = vadd.f32 %v1382, %v1406
      %v1423 = vadd.f32 %v1383, %v1407
      %v1424 = vadd.f32 %v1384, %v1408
      %v1425 = vadd.f32 %v1385, %v1409
      %v1426 = vadd.f32 %v1386, %v1410
      %v1427 = vadd.f32 %v1387, %v1411
      %s1428 = scalar_lea.vmem %s3, 3
      %v1429 = vld [vmem:[%s1428] sm:$0x1]
      %v1431 = vlaneseq
      %v1432 = vshrl.u32 %v1431, 7
      %v1433 = vsub.s32 0, %v1432
      %v1434 = vrot.slane %v1429, %v1433
      %v1436 = vmul.f32 %v1307, %v1434
      %v1437 = vmul.f32 %v1308, %v1434
      %v1438 = vmul.f32 %v1309, %v1434
      %v1439 = vmul.f32 %v1310, %v1434
      %v1440 = vmul.f32 %v1311, %v1434
      %v1441 = vmul.f32 %v1312, %v1434
      %v1442 = vmul.f32 %v1313, %v1434
      %v1443 = vmul.f32 %v1314, %v1434
      %v1444 = vmul.f32 %v1315, %v1434
      %v1445 = vmul.f32 %v1316, %v1434
      %v1446 = vmul.f32 %v1317, %v1434
      %v1447 = vmul.f32 %v1318, %v1434
      %v1448 = vmul.f32 %v1319, %v1434
      %v1449 = vmul.f32 %v1320, %v1434
      %v1450 = vmul.f32 %v1321, %v1434
      %v1451 = vmul.f32 %v1322, %v1434
      %v1452 = vadd.f32 %v1412, %v1436
      %v1453 = vadd.f32 %v1413, %v1437
      %v1454 = vadd.f32 %v1414, %v1438
      %v1455 = vadd.f32 %v1415, %v1439
      %v1456 = vadd.f32 %v1416, %v1440
      %v1457 = vadd.f32 %v1417, %v1441
      %v1458 = vadd.f32 %v1418, %v1442
      %v1459 = vadd.f32 %v1419, %v1443
      %v1460 = vadd.f32 %v1420, %v1444
      %v1461 = vadd.f32 %v1421, %v1445
      %v1462 = vadd.f32 %v1422, %v1446
      %v1463 = vadd.f32 %v1423, %v1447
      %v1464 = vadd.f32 %v1424, %v1448
      %v1465 = vadd.f32 %v1425, %v1449
      %v1466 = vadd.f32 %v1426, %v1450
      %v1467 = vadd.f32 %v1427, %v1451
      %s1468 = scalar_lea.vmem %s3, 4
      %v1469 = vld [vmem:[%s1468] sm:$0x1]
      %v1471 = vlaneseq
      %v1472 = vshrl.u32 %v1471, 7
      %v1473 = vsub.s32 0, %v1472
      %v1474 = vrot.slane %v1469, %v1473
      %v1476 = vmul.f32 %v765, %v1474
      %v1477 = vmul.f32 %v766, %v1474
      %v1478 = vmul.f32 %v767, %v1474
      %v1479 = vmul.f32 %v768, %v1474
      %v1480 = vmul.f32 %v769, %v1474
      %v1481 = vmul.f32 %v770, %v1474
      %v1482 = vmul.f32 %v771, %v1474
      %v1483 = vmul.f32 %v772, %v1474
      %v1484 = vmul.f32 %v773, %v1474
      %v1485 = vmul.f32 %v774, %v1474
      %v1486 = vmul.f32 %v775, %v1474
      %v1487 = vmul.f32 %v776, %v1474
      %v1488 = vmul.f32 %v777, %v1474
      %v1489 = vmul.f32 %v778, %v1474
      %v1490 = vmul.f32 %v779, %v1474
      %v1491 = vmul.f32 %v780, %v1474
      %v1492 = vadd.f32 %v1452, %v1476
      %v1493 = vadd.f32 %v1453, %v1477
      %v1494 = vadd.f32 %v1454, %v1478
      %v1495 = vadd.f32 %v1455, %v1479
      %v1496 = vadd.f32 %v1456, %v1480
      %v1497 = vadd.f32 %v1457, %v1481
      %v1498 = vadd.f32 %v1458, %v1482
      %v1499 = vadd.f32 %v1459, %v1483
      %v1500 = vadd.f32 %v1460, %v1484
      %v1501 = vadd.f32 %v1461, %v1485
      %v1502 = vadd.f32 %v1462, %v1486
      %v1503 = vadd.f32 %v1463, %v1487
      %v1504 = vadd.f32 %v1464, %v1488
      %v1505 = vadd.f32 %v1465, %v1489
      %v1506 = vadd.f32 %v1466, %v1490
      %v1507 = vadd.f32 %v1467, %v1491
      %s1508 = scalar_lea.vmem %s3, 5
      %v1509 = vld [vmem:[%s1508] sm:$0x1]
      %v1511 = vlaneseq
      %v1512 = vshrl.u32 %v1511, 7
      %v1513 = vsub.s32 0, %v1512
      %v1514 = vrot.slane %v1509, %v1513
      %v1516 = vmul.f32 %v1227, %v1514
      %v1517 = vmul.f32 %v1228, %v1514
      %v1518 = vmul.f32 %v1229, %v1514
      %v1519 = vmul.f32 %v1230, %v1514
      %v1520 = vmul.f32 %v1231, %v1514
      %v1521 = vmul.f32 %v1232, %v1514
      %v1522 = vmul.f32 %v1233, %v1514
      %v1523 = vmul.f32 %v1234, %v1514
      %v1524 = vmul.f32 %v1235, %v1514
      %v1525 = vmul.f32 %v1236, %v1514
      %v1526 = vmul.f32 %v1237, %v1514
      %v1527 = vmul.f32 %v1238, %v1514
      %v1528 = vmul.f32 %v1239, %v1514
      %v1529 = vmul.f32 %v1240, %v1514
      %v1530 = vmul.f32 %v1241, %v1514
      %v1531 = vmul.f32 %v1242, %v1514
      %v1532 = vadd.f32 %v1492, %v1516
      %v1533 = vadd.f32 %v1493, %v1517
      %v1534 = vadd.f32 %v1494, %v1518
      %v1535 = vadd.f32 %v1495, %v1519
      %v1536 = vadd.f32 %v1496, %v1520
      %v1537 = vadd.f32 %v1497, %v1521
      %v1538 = vadd.f32 %v1498, %v1522
      %v1539 = vadd.f32 %v1499, %v1523
      %v1540 = vadd.f32 %v1500, %v1524
      %v1541 = vadd.f32 %v1501, %v1525
      %v1542 = vadd.f32 %v1502, %v1526
      %v1543 = vadd.f32 %v1503, %v1527
      %v1544 = vadd.f32 %v1504, %v1528
      %v1545 = vadd.f32 %v1505, %v1529
      %v1546 = vadd.f32 %v1506, %v1530
      %v1547 = vadd.f32 %v1507, %v1531
      %s1548 = scalar_lea.vmem %s3, 6
      %v1549 = vld [vmem:[%s1548] sm:$0x1]
      %v1551 = vlaneseq
      %v1552 = vshrl.u32 %v1551, 7
      %v1553 = vsub.s32 0, %v1552
      %v1554 = vrot.slane %v1549, %v1553
      %v1556 = vmul.f32 %v1309, %v1554
      %v1557 = vmul.f32 %v1310, %v1554
      %v1558 = vmul.f32 %v1311, %v1554
      %v1559 = vmul.f32 %v1312, %v1554
      %v1560 = vmul.f32 %v1313, %v1554
      %v1561 = vmul.f32 %v1314, %v1554
      %v1562 = vmul.f32 %v1315, %v1554
      %v1563 = vmul.f32 %v1316, %v1554
      %v1564 = vmul.f32 %v1317, %v1554
      %v1565 = vmul.f32 %v1318, %v1554
      %v1566 = vmul.f32 %v1319, %v1554
      %v1567 = vmul.f32 %v1320, %v1554
      %v1568 = vmul.f32 %v1321, %v1554
      %v1569 = vmul.f32 %v1322, %v1554
      %v1570 = vmul.f32 %v1323, %v1554
      %v1571 = vmul.f32 %v1324, %v1554
      %v1572 = vadd.f32 %v1532, %v1556
      %v1573 = vadd.f32 %v1533, %v1557
      %v1574 = vadd.f32 %v1534, %v1558
      %v1575 = vadd.f32 %v1535, %v1559
      %v1576 = vadd.f32 %v1536, %v1560
      %v1577 = vadd.f32 %v1537, %v1561
      %v1578 = vadd.f32 %v1538, %v1562
      %v1579 = vadd.f32 %v1539, %v1563
      %v1580 = vadd.f32 %v1540, %v1564
      %v1581 = vadd.f32 %v1541, %v1565
      %v1582 = vadd.f32 %v1542, %v1566
      %v1583 = vadd.f32 %v1543, %v1567
      %v1584 = vadd.f32 %v1544, %v1568
      %v1585 = vadd.f32 %v1545, %v1569
      %v1586 = vadd.f32 %v1546, %v1570
      %v1587 = vadd.f32 %v1547, %v1571
      %s1588 = scalar_lea.vmem %s3, 7
      %v1589 = vld [vmem:[%s1588] sm:$0x1]
      %v1591 = vlaneseq
      %v1592 = vshrl.u32 %v1591, 7
      %v1593 = vsub.s32 0, %v1592
      %v1594 = vrot.slane %v1589, %v1593
      %v1596 = vmul.f32 %v767, %v1594
      %v1597 = vmul.f32 %v768, %v1594
      %v1598 = vmul.f32 %v769, %v1594
      %v1599 = vmul.f32 %v770, %v1594
      %v1600 = vmul.f32 %v771, %v1594
      %v1601 = vmul.f32 %v772, %v1594
      %v1602 = vmul.f32 %v773, %v1594
      %v1603 = vmul.f32 %v774, %v1594
      %v1604 = vmul.f32 %v775, %v1594
      %v1605 = vmul.f32 %v776, %v1594
      %v1606 = vmul.f32 %v777, %v1594
      %v1607 = vmul.f32 %v778, %v1594
      %v1608 = vmul.f32 %v779, %v1594
      %v1609 = vmul.f32 %v780, %v1594
      %v1610 = vmul.f32 %v781, %v1594
      %v1611 = vmul.f32 %v782, %v1594
      %v1612 = vadd.f32 %v1572, %v1596
      %v1613 = vadd.f32 %v1573, %v1597
      %v1614 = vadd.f32 %v1574, %v1598
      %v1615 = vadd.f32 %v1575, %v1599
      %v1616 = vadd.f32 %v1576, %v1600
      %v1617 = vadd.f32 %v1577, %v1601
      %v1618 = vadd.f32 %v1578, %v1602
      %v1619 = vadd.f32 %v1579, %v1603
      %v1620 = vadd.f32 %v1580, %v1604
      %v1621 = vadd.f32 %v1581, %v1605
      %v1622 = vadd.f32 %v1582, %v1606
      %v1623 = vadd.f32 %v1583, %v1607
      %v1624 = vadd.f32 %v1584, %v1608
      %v1625 = vadd.f32 %v1585, %v1609
      %v1626 = vadd.f32 %v1586, %v1610
      %v1627 = vadd.f32 %v1587, %v1611
      %s1628 = scalar_lea.vmem %s3, 8
      %v1629 = vld [vmem:[%s1628] sm:$0x1]
      %v1631 = vlaneseq
      %v1632 = vshrl.u32 %v1631, 7
      %v1633 = vsub.s32 0, %v1632
      %v1634 = vrot.slane %v1629, %v1633
      %v1636 = vmul.f32 %v1229, %v1634
      %v1637 = vmul.f32 %v1230, %v1634
      %v1638 = vmul.f32 %v1231, %v1634
      %v1639 = vmul.f32 %v1232, %v1634
      %v1640 = vmul.f32 %v1233, %v1634
      %v1641 = vmul.f32 %v1234, %v1634
      %v1642 = vmul.f32 %v1235, %v1634
      %v1643 = vmul.f32 %v1236, %v1634
      %v1644 = vmul.f32 %v1237, %v1634
      %v1645 = vmul.f32 %v1238, %v1634
      %v1646 = vmul.f32 %v1239, %v1634
      %v1647 = vmul.f32 %v1240, %v1634
      %v1648 = vmul.f32 %v1241, %v1634
      %v1649 = vmul.f32 %v1242, %v1634
      %v1650 = vmul.f32 %v1243, %v1634
      %v1651 = vmul.f32 %v1244, %v1634
      %v1652 = vadd.f32 %v1612, %v1636
      %v1653 = vadd.f32 %v1613, %v1637
      %v1654 = vadd.f32 %v1614, %v1638
      %v1655 = vadd.f32 %v1615, %v1639
      %v1656 = vadd.f32 %v1616, %v1640
      %v1657 = vadd.f32 %v1617, %v1641
      %v1658 = vadd.f32 %v1618, %v1642
      %v1659 = vadd.f32 %v1619, %v1643
      %v1660 = vadd.f32 %v1620, %v1644
      %v1661 = vadd.f32 %v1621, %v1645
      %v1662 = vadd.f32 %v1622, %v1646
      %v1663 = vadd.f32 %v1623, %v1647
      %v1664 = vadd.f32 %v1624, %v1648
      %v1665 = vadd.f32 %v1625, %v1649
      %v1666 = vadd.f32 %v1626, %v1650
      %v1667 = vadd.f32 %v1627, %v1651
      %v1668 = vld [vmem:[%s4] sm:$0x1]
      %v1670 = vlaneseq
      %v1671 = vshrl.u32 %v1670, 7
      %v1672 = vsub.s32 0, %v1671
      %v1673 = vrot.slane %v1668, %v1672
      %v1675 = vadd.f32 %v1652, %v1673
      %v1676 = vadd.f32 %v1653, %v1673
      %v1677 = vadd.f32 %v1654, %v1673
      %v1678 = vadd.f32 %v1655, %v1673
      %v1679 = vadd.f32 %v1656, %v1673
      %v1680 = vadd.f32 %v1657, %v1673
      %v1681 = vadd.f32 %v1658, %v1673
      %v1682 = vadd.f32 %v1659, %v1673
      %v1683 = vadd.f32 %v1660, %v1673
      %v1684 = vadd.f32 %v1661, %v1673
      %v1685 = vadd.f32 %v1662, %v1673
      %v1686 = vadd.f32 %v1663, %v1673
      %v1687 = vadd.f32 %v1664, %v1673
      %v1688 = vadd.f32 %v1665, %v1673
      %v1689 = vadd.f32 %v1666, %v1673
      %v1690 = vadd.f32 %v1667, %v1673
      %v1691 = vmax.f32 %v1675, 0.0
      %v1692 = vmax.f32 %v1676, 0.0
      %v1693 = vmax.f32 %v1677, 0.0
      %v1694 = vmax.f32 %v1678, 0.0
      %v1695 = vmax.f32 %v1679, 0.0
      %v1696 = vmax.f32 %v1680, 0.0
      %v1697 = vmax.f32 %v1681, 0.0
      %v1698 = vmax.f32 %v1682, 0.0
      %v1699 = vmax.f32 %v1683, 0.0
      %v1700 = vmax.f32 %v1684, 0.0
      %v1701 = vmax.f32 %v1685, 0.0
      %v1702 = vmax.f32 %v1686, 0.0
      %v1703 = vmax.f32 %v1687, 0.0
      %v1704 = vmax.f32 %v1688, 0.0
      %v1705 = vmax.f32 %v1689, 0.0
      %v1706 = vmax.f32 %v1690, 0.0
      %v1707 = vmin.f32 %v1691, 6.0
      %v1708 = vmin.f32 %v1692, 6.0
      %v1709 = vmin.f32 %v1693, 6.0
      %v1710 = vmin.f32 %v1694, 6.0
      %v1711 = vmin.f32 %v1695, 6.0
      %v1712 = vmin.f32 %v1696, 6.0
      %v1713 = vmin.f32 %v1697, 6.0
      %v1714 = vmin.f32 %v1698, 6.0
      %v1715 = vmin.f32 %v1699, 6.0
      %v1716 = vmin.f32 %v1700, 6.0
      %v1717 = vmin.f32 %v1701, 6.0
      %v1718 = vmin.f32 %v1702, 6.0
      %v1719 = vmin.f32 %v1703, 6.0
      %v1720 = vmin.f32 %v1704, 6.0
      %v1721 = vmin.f32 %v1705, 6.0
      %v1722 = vmin.f32 %v1706, 6.0
      %v1723 = vpack.c.bf16 %v1708, %v1707
      %v1724 = vpack.c.bf16 %v1710, %v1709
      %v1725 = vpack.c.bf16 %v1712, %v1711
      %v1726 = vpack.c.bf16 %v1714, %v1713
      %v1727 = vpack.c.bf16 %v1716, %v1715
      %v1728 = vpack.c.bf16 %v1718, %v1717
      %v1729 = vpack.c.bf16 %v1720, %v1719
      %v1730 = vpack.c.bf16 %v1722, %v1721
      %v1731 = vld [vmem:[%s5] sm:$0xf]
      %v1732 = vld [vmem:[%s5 + $0x4] sm:$0xf]
      %v1733 = vld [vmem:[%s5 + $0x8] sm:$0xf]
      %v1737 = vunpack.c.l.b16 %v1731
      %v1738 = vunpack.c.l.b16 %v1732
      %v1739 = vunpack.c.l.b16 %v1733
      %v1740 = vpack.c.b16 %v1738, %v1737
      %v1741 = vpack.c.b16 %v1739, %v1739
      %1759 = vrot.lane.b32.xlu0 %v457, 104
      %v1760 = vpop.permute.xlu0 %1759
      %1761 = vrot.lane.b32.xlu0 %v460, 104
      %v1762 = vpop.permute.xlu0 %1761
      %1763 = vrot.lane.b32.xlu0 %v465, 104
      %v1764 = vpop.permute.xlu0 %1763
      %1765 = vrot.lane.b32.xlu0 %v468, 104
      %v1766 = vpop.permute.xlu0 %1765
      %1767 = vrot.lane.b32.xlu0 %v473, 104
      %v1768 = vpop.permute.xlu0 %1767
      %1769 = vrot.lane.b32.xlu0 %v476, 104
      %v1770 = vpop.permute.xlu0 %1769
      %1771 = vrot.lane.b32.xlu0 %v481, 104
      %v1772 = vpop.permute.xlu0 %1771
      %1773 = vrot.lane.b32.xlu0 %v484, 104
      %v1774 = vpop.permute.xlu0 %1773
      %1775 = vrot.lane.b32.xlu0 %v489, 104
      %v1776 = vpop.permute.xlu0 %1775
      %1777 = vrot.lane.b32.xlu0 %v492, 104
      %v1778 = vpop.permute.xlu0 %1777
      %1779 = vrot.lane.b32.xlu0 %v497, 104
      %v1780 = vpop.permute.xlu0 %1779
      %1781 = vrot.lane.b32.xlu0 %v500, 104
      %v1782 = vpop.permute.xlu0 %1781
      %1783 = vrot.lane.b32.xlu0 %v505, 104
      %v1784 = vpop.permute.xlu0 %1783
      %1785 = vrot.lane.b32.xlu0 %v508, 104
      %v1786 = vpop.permute.xlu0 %1785
      %1787 = vrot.lane.b32.xlu0 %v513, 104
      %v1788 = vpop.permute.xlu0 %1787
      %1789 = vrot.lane.b32.xlu0 %v516, 104
      %v1790 = vpop.permute.xlu0 %1789
      %vm1807 = vcmask 195584
      %v1809 = vsel %vm1807, %v1723, 0
      %v1812 = vsel %vm1807, %v1724, 0
      %v1815 = vsel %vm1807, %v1725, 0
      %v1818 = vsel %vm1807, %v1726, 0
      %v1821 = vsel %vm1807, %v1727, 0
      %v1824 = vsel %vm1807, %v1728, 0
      %v1827 = vsel %vm1807, %v1729, 0
      %v1830 = vsel %vm1807, %v1730, 0
      %vm1832 = vcmask 1043456
      %v1834 = vsel %vm1832, %v1741, 0
      %1836 = vmatprep.subr.bf16.mxu0 0
      %1837 = vmatpush1.bf16.msra.mxu0 %v1740
      %1838 = vmatprep.subr.bf16.mxu0 0
      %1839 = vmatpush1.bf16.msra.mxu0 %v1834
      %1840 = vmatprep.subr.bf16.mxu0 0
      %1841 = vmatpush1.bf16.msra.mxu0 0
      %1842 = vmatprep.subr.bf16.mxu0 0
      %1843 = vmatpush1.bf16.msra.mxu0 0
      %1844 = vmatprep.subr.bf16.mxu0 0
      %1845 = vmatpush1.bf16.msra.mxu0 0
      %1846 = vmatprep.subr.bf16.mxu0 0
      %1847 = vmatpush1.bf16.msra.mxu0 0
      %1848 = vmatprep.subr.bf16.mxu0 0
      %1849 = vmatpush1.bf16.msra.mxu0 0
      %1850 = vmatprep.subr.bf16.mxu0 0
      %1851 = vmatpush1.bf16.msra.mxu0 0
      %1852 = vmatprep.subr.bf16.mxu0 0
      %1853 = vmatpush1.bf16.msra.mxu0 0
      %1854 = vmatprep.subr.bf16.mxu0 0
      %1855 = vmatpush1.bf16.msra.mxu0 0
      %1856 = vmatprep.subr.bf16.mxu0 0
      %1857 = vmatpush1.bf16.msra.mxu0 0
      %1858 = vmatprep.subr.bf16.mxu0 0
      %1859 = vmatpush1.bf16.msra.mxu0 0
      %1860 = vmatprep.subr.bf16.mxu0 0
      %1861 = vmatpush1.bf16.msra.mxu0 0
      %1862 = vmatprep.subr.bf16.mxu0 0
      %1863 = vmatpush1.bf16.msra.mxu0 0
      %1864 = vmatprep.subr.bf16.mxu0 0
      %1865 = vmatpush1.bf16.msra.mxu0 0
      %1866 = vmatprep.subr.bf16.mxu0 0
      %1867 = vmatpush1.bf16.msra.mxu0 0
      %1868 = vmatprep.mubr.bf16.mxu0 0
      %1869 = vmatmul.mubr.bf16.gmra.mrb[0].mxu0 %v1809
      %v1870 = vpop.f32.mrb[0].mxu0
      %v1871 = vadd.f32 %v1760, %v1870
      %v1872 = vpop.f32.mrb[0].mxu0
      %v1873 = vpop.f32.mrb[0].mxu0
      %v1874 = vadd.f32 %v1762, %v1873
      %v1875 = vpop.f32.mrb[0].mxu0
      %1876 = vmatprep.mubr.bf16.mxu0 0
      %1877 = vmatmul.mubr.bf16.gmra.mrb[0].mxu0 %v1812
      %v1878 = vpop.f32.mrb[0].mxu0
      %v1879 = vadd.f32 %v1764, %v1878
      %v1880 = vpop.f32.mrb[0].mxu0
      %v1881 = vpop.f32.mrb[0].mxu0
      %v1882 = vadd.f32 %v1766, %v1881
      %v1883 = vpop.f32.mrb[0].mxu0
      %1884 = vmatprep.mubr.bf16.mxu0 0
      %1885 = vmatmul.mubr.bf16.gmra.mrb[0].mxu0 %v1815
      %v1886 = vpop.f32.mrb[0].mxu0
      %v1887 = vadd.f32 %v1768, %v1886
      %v1888 = vpop.f32.mrb[0].mxu0
      %v1889 = vpop.f32.mrb[0].mxu0
      %v1890 = vadd.f32 %v1770, %v1889
      %v1891 = vpop.f32.mrb[0].mxu0
      %1892 = vmatprep.mubr.bf16.mxu0 0
      %1893 = vmatmul.mubr.bf16.gmra.mrb[0].mxu0 %v1818
      %v1894 = vpop.f32.mrb[0].mxu0
      %v1895 = vadd.f32 %v1772, %v1894
      %v1896 = vpop.f32.mrb[0].mxu0
      %v1897 = vpop.f32.mrb[0].mxu0
      %v1898 = vadd.f32 %v1774, %v1897
      %v1899 = vpop.f32.mrb[0].mxu0
      %1900 = vmatprep.mubr.bf16.mxu0 0
      %1901 = vmatmul.mubr.bf16.gmra.mrb[0].mxu0 %v1821
      %v1902 = vpop.f32.mrb[0].mxu0
      %v1903 = vadd.f32 %v1776, %v1902
      %v1904 = vpop.f32.mrb[0].mxu0
      %v1905 = vpop.f32.mrb[0].mxu0
      %v1906 = vadd.f32 %v1778, %v1905
      %v1907 = vpop.f32.mrb[0].mxu0
      %1908 = vmatprep.mubr.bf16.mxu0 0
      %1909 = vmatmul.mubr.bf16.gmra.mrb[0].mxu0 %v1824
      %v1910 = vpop.f32.mrb[0].mxu0
      %v1911 = vadd.f32 %v1780, %v1910
      %v1912 = vpop.f32.mrb[0].mxu0
      %v1913 = vpop.f32.mrb[0].mxu0
      %v1914 = vadd.f32 %v1782, %v1913
      %v1915 = vpop.f32.mrb[0].mxu0
      %1916 = vmatprep.mubr.bf16.mxu0 0
      %1917 = vmatmul.mubr.bf16.gmra.mrb[0].mxu0 %v1827
      %v1918 = vpop.f32.mrb[0].mxu0
      %v1919 = vadd.f32 %v1784, %v1918
      %v1920 = vpop.f32.mrb[0].mxu0
      %v1921 = vpop.f32.mrb[0].mxu0
      %v1922 = vadd.f32 %v1786, %v1921
      %v1923 = vpop.f32.mrb[0].mxu0
      %1924 = vmatprep.mubr.bf16.mxu0 0
      %1925 = vmatmul.mubr.bf16.gmra.mrb[0].mxu0 %v1830
      %v1926 = vpop.f32.mrb[0].mxu0
      %v1927 = vadd.f32 %v1788, %v1926
      %v1928 = vpop.f32.mrb[0].mxu0
      %v1929 = vpop.f32.mrb[0].mxu0
      %v1930 = vadd.f32 %v1790, %v1929
      %v1931 = vpop.f32.mrb[0].mxu0
      %1932 = vdwg.mxu0
      %v1933 = vld [vmem:[%s6] sm:$0x1]
      %v1935 = vlaneseq
      %v1936 = vshrl.u32 %v1935, 7
      %v1937 = vsub.s32 0, %v1936
      %v1938 = vrot.slane %v1933, %v1937
      %v1940 = vadd.f32 %v1871, %v1938
      %v1941 = vadd.f32 %v1874, %v1938
      %v1942 = vadd.f32 %v1879, %v1938
      %v1943 = vadd.f32 %v1882, %v1938
      %v1944 = vadd.f32 %v1887, %v1938
      %v1945 = vadd.f32 %v1890, %v1938
      %v1946 = vadd.f32 %v1895, %v1938
      %v1947 = vadd.f32 %v1898, %v1938
      %v1948 = vadd.f32 %v1903, %v1938
      %v1949 = vadd.f32 %v1906, %v1938
      %v1950 = vadd.f32 %v1911, %v1938
      %v1951 = vadd.f32 %v1914, %v1938
      %v1952 = vadd.f32 %v1919, %v1938
      %v1953 = vadd.f32 %v1922, %v1938
      %v1954 = vadd.f32 %v1927, %v1938
      %v1955 = vadd.f32 %v1930, %v1938
      %vm1956 = vcmask 64512
      %1957 = vst.msk [vmem:[%s300] sm:$0xff] %vm1956, %v1940
      %1958 = vst.msk [vmem:[%s300 + $0x8] sm:$0xff] %vm1956, %v1941
      %1959 = vst.msk [vmem:[%s300 + $0x10] sm:$0xff] %vm1956, %v1942
      %1960 = vst.msk [vmem:[%s300 + $0x18] sm:$0xff] %vm1956, %v1943
      %1961 = vst.msk [vmem:[%s300 + $0x20] sm:$0xff] %vm1956, %v1944
      %1962 = vst.msk [vmem:[%s300 + $0x28] sm:$0xff] %vm1956, %v1945
      %1963 = vst.msk [vmem:[%s300 + $0x30] sm:$0xff] %vm1956, %v1946
      %1964 = vst.msk [vmem:[%s300 + $0x38] sm:$0xff] %vm1956, %v1947
      %1965 = vst.msk [vmem:[%s300 + $0x40] sm:$0xff] %vm1956, %v1948
      %1966 = vst.msk [vmem:[%s300 + $0x48] sm:$0xff] %vm1956, %v1949
      %1967 = vst.msk [vmem:[%s300 + $0x50] sm:$0xff] %vm1956, %v1950
      %1968 = vst.msk [vmem:[%s300 + $0x58] sm:$0xff] %vm1956, %v1951
      %1969 = vst.msk [vmem:[%s300 + $0x60] sm:$0xff] %vm1956, %v1952
      %1970 = vst.msk [vmem:[%s300 + $0x68] sm:$0xff] %vm1956, %v1953
      %1971 = vst.msk [vmem:[%s300 + $0x70] sm:$0xff] %vm1956, %v1954
      %1972 = vst.msk [vmem:[%s300 + $0x78] sm:$0xff] %vm1956, %v1955
      %s1973 = smul.u32 16, %s23
      %p1974 = scmp.lt.s32.totalorder %s22, 1
      %s1975 = scalar_select %p1974, %s22, 1
      %p1976 = scmp.lt.s32.totalorder %s1973, 31
      %s1977 = scalar_select %p1976, %s1973, 31
      %s1978 = smul.addr %s1975, 32
      %s1979 = sadd.s32 %s1977, %s1978
      %s1980 = smul.addr %s1979, 8
      %s1981 = scalar_lea.vmem %s7, %s1980
      // Predicated region
      $region49: #{tpu_custom_call.1} parent=47 // pred_check
        %p1982 = pneg %p202
      $region50: #{tpu_custom_call.1} parent=47 // pred_check_branch
        %1984 = sbr.rel (%p1982) target = $region52
      $region51: #{tpu_custom_call.1} parent=47 // pred_region
        %s1985 = smul.u32 16, %s23
      $region52: #{tpu_custom_call.1} parent=47 // pred_fallthru
        _
    $region48: #{tpu_custom_call.1} parent=5 // pred_fallthru
      _
    %p1986 = scmp.le.s32.totalorder 2, %s13
    // Predicated region
    $region53: #{tpu_custom_call.1} parent=5 // pred_check
      %p1987 = pneg %p1986
    $region54: #{tpu_custom_call.1} parent=5 // pred_check_branch
      %1989 = sbr.rel (%p1987) target = $region56
    $region55: #{tpu_custom_call.1} parent=5 // pred_region
      %s1990 = ssub.s32 %s13, 2
      // Predicated region
      $region57: #{tpu_custom_call.1} parent=55 // pred_check
        %p1991 = pneg %p208
      $region58: #{tpu_custom_call.1} parent=55 // pred_check_branch
        %1993 = sbr.rel (%p1991) target = $region60
      $region59: #{tpu_custom_call.1} parent=55 // pred_region
        %s1994 = smul.u32 16, %s25
        %p1995 = scmp.lt.s32.totalorder %s24, 1
        %s1996 = scalar_select %p1995, %s24, 1
        %p1997 = scmp.lt.s32.totalorder %s1994, 31
        %s1998 = scalar_select %p1997, %s1994, 31
        %s1999 = smul.addr %s1996, 32
        %s2000 = sadd.s32 %s1998, %s1999
        %s2001 = smul.addr %s2000, 8
        %s2002 = scalar_lea.vmem %s7, %s2001
      $region60: #{tpu_custom_call.1} parent=55 // pred_fallthru
        _
    $region56: #{tpu_custom_call.1} parent=5 // pred_fallthru
      _
  $region6: #{tpu_custom_call.1} parent=0 // loop_footer
    %s17 = sadd.s32 1, %s13
  $region7: #{tpu_custom_call.1} parent=0 // loop_footer_branch
    %12 = sbr.rel target = $region3
  $region8: #{tpu_custom_call.1} parent=0 // loop_exit
    _

</llo_original>
